<compile_context>
chip_gen: v6e
topology: v6e:2x2x1
jax: 0.10.0
libtpu: 0.0.40
codegen_flags: <defaults>
</compile_context>

<pallas_src>
import functools

import jax
import jax.numpy as jnp
from jax.experimental import pallas as pl
from jax.experimental.pallas import tpu as pltpu


# ---------------------------------------------------------------------------
# helpers
# ---------------------------------------------------------------------------
def _round_up(a, b):
    return (a + b - 1) // b * b


def _layernorm_f32(x, gamma, beta, eps=1e-5):
    # x: (rows, C) f32; gamma/beta: (1, C) f32. Matches torch.nn.LayerNorm.
    mu = jnp.mean(x, axis=-1, keepdims=True)
    var = jnp.mean(jnp.square(x - mu), axis=-1, keepdims=True)
    return (x - mu) * jax.lax.rsqrt(var + eps) * gamma + beta


# ---------------------------------------------------------------------------
# kernel 1: x = x + proj(MHSA(LayerNorm1(x)))        (one batch element / step)
# ---------------------------------------------------------------------------
def _attn_residual_kernel(x_ref, g_ref, beta_ref, wqkv_ref, bqkv_ref,
                          wproj_ref, bproj_ref, o_ref, *, num_heads, scale):
    x = x_ref[0].astype(jnp.float32)                       # (N, C)
    C = x.shape[-1]
    hd = C // num_heads
    cdt = wqkv_ref.dtype                                   # bf16 matmul operands

    y = _layernorm_f32(x, g_ref[...], beta_ref[...])

    # fused qkv projection, f32 accumulate
    qkv = jnp.dot(y.astype(cdt), wqkv_ref[...],
                  preferred_element_type=jnp.float32) + bqkv_ref[...]   # (N, 3C)

    heads = []
    for h in range(num_heads):                             # static unroll
        lo = h * hd
        qh = qkv[:, lo:lo + hd].astype(cdt)
        kh = qkv[:, C + lo:C + lo + hd].astype(cdt)
        vh = qkv[:, 2 * C + lo:2 * C + lo + hd].astype(cdt)

        s = jnp.dot(qh, kh.T, preferred_element_type=jnp.float32) * scale
        s = s - jnp.max(s, axis=-1, keepdims=True)         # exact softmax, f32
        e = jnp.exp(s)
        p = e / jnp.sum(e, axis=-1, keepdims=True)
        heads.append(jnp.dot(p.astype(cdt), vh,
                             preferred_element_type=jnp.float32))
    attn_out = jnp.concatenate(heads, axis=-1)             # (N, C) f32

    proj = jnp.dot(attn_out.astype(cdt), wproj_ref[...],
                   preferred_element_type=jnp.float32) + bproj_ref[...]

    o_ref[0] = (x + proj).astype(o_ref.dtype)              # residual add


def attn_residual_pallas(x, gamma, beta, wqkv, bqkv, wproj, bproj, *,
                         num_heads, qk_scale=None,
                         matmul_dtype=jnp.bfloat16,
                         vmem_limit_bytes=64 * 1024 * 1024):
    B, N, C = x.shape
    hd = C // num_heads
    scale = float(qk_scale) if qk_scale is not None else float(hd) ** (-0.5)

    kernel = functools.partial(_attn_residual_kernel,
                               num_heads=num_heads, scale=scale)

    return pl.pallas_call(
        kernel,
        out_shape=jax.ShapeDtypeStruct((B, N, C), x.dtype),
        grid_spec=pltpu.PrefetchScalarGridSpec(
            num_scalar_prefetch=0,
            grid=(B,),
            in_specs=[
                pl.BlockSpec((1, N, C), lambda b: (b, 0, 0)),    # x (per batch)
                pl.BlockSpec((1, C), lambda b: (0, 0)),          # norm1 gamma
                pl.BlockSpec((1, C), lambda b: (0, 0)),          # norm1 beta
                pl.BlockSpec((C, 3 * C), lambda b: (0, 0)),      # Wqkv (bf16)
                pl.BlockSpec((1, 3 * C), lambda b: (0, 0)),      # bqkv
                pl.BlockSpec((C, C), lambda b: (0, 0)),          # Wproj (bf16)
                pl.BlockSpec((1, C), lambda b: (0, 0)),          # bproj
            ],
            out_specs=pl.BlockSpec((1, N, C), lambda b: (b, 0, 0)),
        ),
        compiler_params=pltpu.CompilerParams(
            dimension_semantics=("parallel",),
            vmem_limit_bytes=vmem_limit_bytes),
    )(x, gamma.reshape(1, C), beta.reshape(1, C),
      wqkv.astype(matmul_dtype), bqkv.reshape(1, 3 * C),
      wproj.astype(matmul_dtype), bproj.reshape(1, C))


# ---------------------------------------------------------------------------
# kernel 2: x = x + fc2(GELU(fc1(LayerNorm2(x))))      (row-tiled over tokens)
# ---------------------------------------------------------------------------
def _mlp_residual_kernel(x_ref, g_ref, beta_ref, w1_ref, b1_ref,
                         w2_ref, b2_ref, o_ref, *, gelu_approx):
    x = x_ref[...].astype(jnp.float32)                     # (tm, C)
    cdt = w1_ref.dtype

    y = _layernorm_f32(x, g_ref[...], beta_ref[...])

    h = jnp.dot(y.astype(cdt), w1_ref[...],
                preferred_element_type=jnp.float32) + b1_ref[...]
    # nn.GELU() default is the exact erf form -> keep forward semantics.
    h = jax.nn.gelu(h, approximate=gelu_approx)

    m = jnp.dot(h.astype(cdt), w2_ref[...],
                preferred_element_type=jnp.float32) + b2_ref[...]

    o_ref[...] = (x + m).astype(o_ref.dtype)               # residual add


def mlp_residual_pallas(x, gamma, beta, w1, bfc1, w2, bfc2, *,
                        tm=512, gelu_approx=False,
                        matmul_dtype=jnp.bfloat16,
                        vmem_limit_bytes=64 * 1024 * 1024):
    B, N, C = x.shape
    H = w1.shape[1]
    M = B * N

    x2 = x.reshape(M, C)
    # Large row tile (multiple of 256 when possible); pad the row count instead
    # of asserting divisibility so arbitrary token counts keep the fast path.
    tm_eff = min(tm, _round_up(M, 8))
    Mp = _round_up(M, tm_eff)
    if Mp != M:
        x2 = jnp.pad(x2, ((0, Mp - M), (0, 0)))

    out2 = pl.pallas_call(
        functools.partial(_mlp_residual_kernel, gelu_approx=gelu_approx),
        out_shape=jax.ShapeDtypeStruct((Mp, C), x.dtype),
        grid_spec=pltpu.PrefetchScalarGridSpec(
            num_scalar_prefetch=0,
            grid=(Mp // tm_eff,),
            in_specs=[
                pl.BlockSpec((tm_eff, C), lambda i: (i, 0)),     # x row tile
                pl.BlockSpec((1, C), lambda i: (0, 0)),          # norm2 gamma
                pl.BlockSpec((1, C), lambda i: (0, 0)),          # norm2 beta
                pl.BlockSpec((C, H), lambda i: (0, 0)),          # W1 (bf16)
                pl.BlockSpec((1, H), lambda i: (0, 0)),          # b1
                pl.BlockSpec((H, C), lambda i: (0, 0)),          # W2 (bf16)
                pl.BlockSpec((1, C), lambda i: (0, 0)),          # b2
            ],
            out_specs=pl.BlockSpec((tm_eff, C), lambda i: (i, 0)),
        ),
        compiler_params=pltpu.CompilerParams(
            dimension_semantics=("parallel",),
            vmem_limit_bytes=vmem_limit_bytes),
    )(x2, gamma.reshape(1, C), beta.reshape(1, C),
      w1.astype(matmul_dtype), bfc1.reshape(1, H),
      w2.astype(matmul_dtype), bfc2.reshape(1, C))

    return out2[:M].reshape(B, N, C)


# ---------------------------------------------------------------------------
# full decoder forward
# ---------------------------------------------------------------------------
def transformer_decoder_pallas(x, blocks, *, num_heads, return_token_num=0,
                               matmul_dtype=jnp.bfloat16):
    for p in blocks:
        x = attn_residual_pallas(x, p["g1"], p["b1"], p["wqkv"], p["bqkv"],
                                 p["wproj"], p["bproj"],
                                 num_heads=num_heads, matmul_dtype=matmul_dtype)
        x = mlp_residual_pallas(x, p["g2"], p["b2"], p["w1"], p["bfc1"],
                                p["w2"], p["bfc2"], matmul_dtype=matmul_dtype)
    if return_token_num > 0:
        x = x[:, -return_token_num:]
    return x


# ---------------------------------------------------------------------------
# pure-JAX f32 reference (mirrors the PyTorch module exactly)
# ---------------------------------------------------------------------------
def _ln_ref(x, g, b, eps=1e-5):
    mu = jnp.mean(x, -1, keepdims=True)
    var = jnp.mean(jnp.square(x - mu), -1, keepdims=True)
    return (x - mu) / jnp.sqrt(var + eps) * g + b


def _reference_decoder(x, blocks, num_heads, return_token_num=0):
    B, N, C = x.shape
    hd = C // num_heads
    scale = float(hd) ** (-0.5)
    for p in blocks:
        y = _ln_ref(x, p["g1"], p["b1"])
        qkv = (y @ p["wqkv"] + p["bqkv"]).reshape(B, N, 3, num_heads, hd)
        qkv = qkv.transpose(2, 0, 3, 1, 4)
        q, k, v = qkv[0], qkv[1], qkv[2]
        attn = jnp.einsum("bhqd,bhkd->bhqk", q, k) * scale
        attn = jax.nn.softmax(attn, axis=-1)
        o = jnp.einsum("bhqk,bhkd->bhqd", attn, v)
        o = o.transpose(0, 2, 1, 3).reshape(B, N, C)
        x = x + (o @ p["wproj"] + p["bproj"])
        y2 = _ln_ref(x, p["g2"], p["b2"])
        h = jax.nn.gelu(y2 @ p["w1"] + p["bfc1"], approximate=False)
        x = x + (h @ p["w2"] + p["bfc2"])
    if return_token_num > 0:
        x = x[:, -return_token_num:]
    return x


def _init_params(key, depth, C, H):
    blocks = []
    for _ in range(depth):
        key, *ks = jax.random.split(key, 12)
        blocks.append(dict(
            g1=1.0 + 0.1 * jax.random.normal(ks[0], (C,), jnp.float32),
            b1=0.05 * jax.random.normal(ks[1], (C,), jnp.float32),
            wqkv=0.05 * jax.random.normal(ks[2], (C, 3 * C), jnp.float32),
            bqkv=jnp.zeros((3 * C,), jnp.float32),   # qkv_bias=False
            wproj=0.05 * jax.random.normal(ks[3], (C, C), jnp.float32),
            bproj=0.02 * jax.random.normal(ks[4], (C,), jnp.float32),
            g2=1.0 + 0.1 * jax.random.normal(ks[5], (C,), jnp.float32),
            b2=0.05 * jax.random.normal(ks[6], (C,), jnp.float32),
            w1=0.05 * jax.random.normal(ks[7], (C, H), jnp.float32),
            bfc1=0.02 * jax.random.normal(ks[8], (H,), jnp.float32),
            w2=0.05 * jax.random.normal(ks[9], (H, C), jnp.float32),
            bfc2=0.02 * jax.random.normal(ks[10], (C,), jnp.float32),
        ))
    return blocks


if __name__ == "__main__":
    # Small, lane-dense shapes consistent with the module
    # (embed_dim multiple of 128, hidden = 4*embed_dim).
    B, N = 2, 16
    embed_dim, num_heads, depth = 128, 4, 2
    hidden = int(embed_dim * 4.0)

    key = jax.random.PRNGKey(0)
    kx, kp = jax.random.split(key)
    x = jax.random.normal(kx, (B, N, embed_dim), dtype=jnp.float32)
    blocks = _init_params(kp, depth, embed_dim, hidden)

    out = transformer_decoder_pallas(x, blocks, num_heads=num_heads,
                                     return_token_num=0)
    out = jax.block_until_ready(out)

    ref = _reference_decoder(x, blocks, num_heads, return_token_num=0)
    assert out.shape == ref.shape
    # bf16 MXU operands vs. f32 reference -> loose tolerance.
    max_err = float(jnp.max(jnp.abs(out - ref)))
    assert max_err < 5e-2, f"max abs err {max_err}"

    print("KERNEL_OK")
</pallas_src>

<mosaic_0001>
module attributes {stable_mosaic.version = 11 : i64} {
  func.func @_attn_residual_kernel(%arg0: i32, %arg1: memref<1x16x128xf32, #tpu.memory_space<vmem>>, %arg2: memref<1x128xf32, #tpu.memory_space<vmem>>, %arg3: memref<1x128xf32, #tpu.memory_space<vmem>>, %arg4: memref<128x384xbf16, #tpu.memory_space<vmem>>, %arg5: memref<1x384xf32, #tpu.memory_space<vmem>>, %arg6: memref<128x128xbf16, #tpu.memory_space<vmem>>, %arg7: memref<1x128xf32, #tpu.memory_space<vmem>>, %arg8: memref<1x16x128xf32, #tpu.memory_space<vmem>>) attributes {dimension_semantics = [#tpu.dimension_semantics<parallel>], iteration_bounds = array<i64: 2>, scalar_prefetch = 0 : i64, scratch_operands = 0 : i64, tpu.core_type = #tpu.core_type<tc>, window_params = [{transform_indices = @transform_0, window_bounds = array<i64: 1, 16, 128>}, {pipeline_mode = #tpu.pipeline_mode<synchronous>, transform_indices = @transform_1, window_bounds = array<i64: 1, 128>}, {pipeline_mode = #tpu.pipeline_mode<synchronous>, transform_indices = @transform_2, window_bounds = array<i64: 1, 128>}, {pipeline_mode = #tpu.pipeline_mode<synchronous>, transform_indices = @transform_3, window_bounds = array<i64: 128, 384>}, {pipeline_mode = #tpu.pipeline_mode<synchronous>, transform_indices = @transform_4, window_bounds = array<i64: 1, 384>}, {pipeline_mode = #tpu.pipeline_mode<synchronous>, transform_indices = @transform_5, window_bounds = array<i64: 128, 128>}, {pipeline_mode = #tpu.pipeline_mode<synchronous>, transform_indices = @transform_6, window_bounds = array<i64: 1, 128>}, {transform_indices = @transform_7, window_bounds = array<i64: 1, 16, 128>}]} {
    %c0 = arith.constant 0 : index
    %c0_0 = arith.constant 0 : index
    %c0_1 = arith.constant 0 : index
    %0 = vector.load %arg1[%c0, %c0_0, %c0_1] : memref<1x16x128xf32, #tpu.memory_space<vmem>>, vector<1x16x128xf32>
    %1 = vector.shape_cast %0 : vector<1x16x128xf32> to vector<16x128xf32>
    %c0_2 = arith.constant 0 : index
    %c0_3 = arith.constant 0 : index
    %2 = vector.load %arg2[%c0_2, %c0_3] : memref<1x128xf32, #tpu.memory_space<vmem>>, vector<1x128xf32>
    %c0_4 = arith.constant 0 : index
    %c0_5 = arith.constant 0 : index
    %3 = vector.load %arg3[%c0_4, %c0_5] : memref<1x128xf32, #tpu.memory_space<vmem>>, vector<1x128xf32>
    %cst = arith.constant dense<0.000000e+00> : vector<16xf32>
    %4 = vector.multi_reduction <add>, %1, %cst [1] : vector<16x128xf32> to vector<16xf32>
    %5 = vector.shape_cast %4 : vector<16xf32> to vector<16x1xf32>
    %cst_6 = arith.constant 1.280000e+02 : f32
    %6 = vector.broadcast %cst_6 : f32 to vector<16x1xf32>
    %7 = arith.divf %5, %6 : vector<16x1xf32>
    %8 = vector.broadcast %7 : vector<16x1xf32> to vector<16x128xf32>
    %9 = arith.subf %1, %8 : vector<16x128xf32>
    %10 = arith.mulf %9, %9 : vector<16x128xf32>
    %cst_7 = arith.constant dense<0.000000e+00> : vector<16xf32>
    %11 = vector.multi_reduction <add>, %10, %cst_7 [1] : vector<16x128xf32> to vector<16xf32>
    %12 = vector.shape_cast %11 : vector<16xf32> to vector<16x1xf32>
    %cst_8 = arith.constant 1.280000e+02 : f32
    %13 = vector.broadcast %cst_8 : f32 to vector<16x1xf32>
    %14 = arith.divf %12, %13 : vector<16x1xf32>
    %15 = vector.broadcast %7 : vector<16x1xf32> to vector<16x128xf32>
    %16 = arith.subf %1, %15 : vector<16x128xf32>
    %cst_9 = arith.constant 9.99999974E-6 : f32
    %17 = vector.broadcast %cst_9 : f32 to vector<16x1xf32>
    %18 = arith.addf %14, %17 : vector<16x1xf32>
    %19 = math.rsqrt %18 : vector<16x1xf32>
    %20 = vector.broadcast %19 : vector<16x1xf32> to vector<16x128xf32>
    %21 = arith.mulf %16, %20 : vector<16x128xf32>
    %22 = vector.broadcast %2 : vector<1x128xf32> to vector<16x128xf32>
    %23 = arith.mulf %21, %22 : vector<16x128xf32>
    %24 = vector.broadcast %3 : vector<1x128xf32> to vector<16x128xf32>
    %25 = arith.addf %23, %24 : vector<16x128xf32>
    %26 = arith.truncf %25 : vector<16x128xf32> to vector<16x128xbf16>
    %c0_10 = arith.constant 0 : index
    %c0_11 = arith.constant 0 : index
    %27 = vector.load %arg4[%c0_10, %c0_11] : memref<128x384xbf16, #tpu.memory_space<vmem>>, vector<128x384xbf16>
    %cst_12 = arith.constant dense<0.000000e+00> : vector<16x384xf32>
    %28 = tpu.matmul %26, %27, %cst_12 {dimension_numbers = #tpu.dot_dimension_numbers<[1], [0], [0], [1], [0, 0, 1, 1], [], []>} : vector<16x128xbf16>, vector<128x384xbf16>, vector<16x384xf32> -> vector<16x384xf32>
    %c0_13 = arith.constant 0 : index
    %c0_14 = arith.constant 0 : index
    %29 = vector.load %arg5[%c0_13, %c0_14] : memref<1x384xf32, #tpu.memory_space<vmem>>, vector<1x384xf32>
    %30 = vector.broadcast %29 : vector<1x384xf32> to vector<16x384xf32>
    %31 = arith.addf %28, %30 : vector<16x384xf32>
    %32 = vector.extract_strided_slice %31 {offsets = [0, 0], sizes = [16, 32], strides = [1, 1]} : vector<16x384xf32> to vector<16x32xf32>
    %33 = arith.truncf %32 : vector<16x32xf32> to vector<16x32xbf16>
    %34 = vector.extract_strided_slice %31 {offsets = [0, 128], sizes = [16, 32], strides = [1, 1]} : vector<16x384xf32> to vector<16x32xf32>
    %35 = arith.truncf %34 : vector<16x32xf32> to vector<16x32xbf16>
    %36 = vector.extract_strided_slice %31 {offsets = [0, 256], sizes = [16, 32], strides = [1, 1]} : vector<16x384xf32> to vector<16x32xf32>
    %37 = arith.truncf %36 : vector<16x32xf32> to vector<16x32xbf16>
    %38 = tpu.transpose %35, [1, 0] : vector<16x32xbf16> -> vector<32x16xbf16>
    %cst_15 = arith.constant dense<0.000000e+00> : vector<16x16xf32>
    %39 = tpu.matmul %33, %38, %cst_15 {dimension_numbers = #tpu.dot_dimension_numbers<[1], [0], [0], [1], [0, 0, 1, 1], [], []>} : vector<16x32xbf16>, vector<32x16xbf16>, vector<16x16xf32> -> vector<16x16xf32>
    %cst_16 = arith.constant 0.176776692 : f32
    %40 = vector.broadcast %cst_16 : f32 to vector<16x16xf32>
    %41 = arith.mulf %39, %40 : vector<16x16xf32>
    %cst_17 = arith.constant dense<0xFF800000> : vector<16xf32>
    %42 = vector.multi_reduction <maximumf>, %41, %cst_17 [1] : vector<16x16xf32> to vector<16xf32>
    %43 = vector.shape_cast %42 : vector<16xf32> to vector<16x1xf32>
    %44 = vector.broadcast %43 : vector<16x1xf32> to vector<16x16xf32>
    %45 = arith.subf %41, %44 : vector<16x16xf32>
    %46 = math.exp %45 : vector<16x16xf32>
    %cst_18 = arith.constant dense<0.000000e+00> : vector<16xf32>
    %47 = vector.multi_reduction <add>, %46, %cst_18 [1] : vector<16x16xf32> to vector<16xf32>
    %48 = vector.shape_cast %47 : vector<16xf32> to vector<16x1xf32>
    %49 = vector.broadcast %48 : vector<16x1xf32> to vector<16x16xf32>
    %50 = arith.divf %46, %49 : vector<16x16xf32>
    %51 = arith.truncf %50 : vector<16x16xf32> to vector<16x16xbf16>
    %cst_19 = arith.constant dense<0.000000e+00> : vector<16x32xf32>
    %52 = tpu.matmul %51, %37, %cst_19 {dimension_numbers = #tpu.dot_dimension_numbers<[1], [0], [0], [1], [0, 0, 1, 1], [], []>} : vector<16x16xbf16>, vector<16x32xbf16>, vector<16x32xf32> -> vector<16x32xf32>
    %53 = vector.extract_strided_slice %31 {offsets = [0, 32], sizes = [16, 32], strides = [1, 1]} : vector<16x384xf32> to vector<16x32xf32>
    %54 = arith.truncf %53 : vector<16x32xf32> to vector<16x32xbf16>
    %55 = vector.extract_strided_slice %31 {offsets = [0, 160], sizes = [16, 32], strides = [1, 1]} : vector<16x384xf32> to vector<16x32xf32>
    %56 = arith.truncf %55 : vector<16x32xf32> to vector<16x32xbf16>
    %57 = vector.extract_strided_slice %31 {offsets = [0, 288], sizes = [16, 32], strides = [1, 1]} : vector<16x384xf32> to vector<16x32xf32>
    %58 = arith.truncf %57 : vector<16x32xf32> to vector<16x32xbf16>
    %59 = tpu.transpose %56, [1, 0] : vector<16x32xbf16> -> vector<32x16xbf16>
    %cst_20 = arith.constant dense<0.000000e+00> : vector<16x16xf32>
    %60 = tpu.matmul %54, %59, %cst_20 {dimension_numbers = #tpu.dot_dimension_numbers<[1], [0], [0], [1], [0, 0, 1, 1], [], []>} : vector<16x32xbf16>, vector<32x16xbf16>, vector<16x16xf32> -> vector<16x16xf32>
    %cst_21 = arith.constant 0.176776692 : f32
    %61 = vector.broadcast %cst_21 : f32 to vector<16x16xf32>
    %62 = arith.mulf %60, %61 : vector<16x16xf32>
    %cst_22 = arith.constant dense<0xFF800000> : vector<16xf32>
    %63 = vector.multi_reduction <maximumf>, %62, %cst_22 [1] : vector<16x16xf32> to vector<16xf32>
    %64 = vector.shape_cast %63 : vector<16xf32> to vector<16x1xf32>
    %65 = vector.broadcast %64 : vector<16x1xf32> to vector<16x16xf32>
    %66 = arith.subf %62, %65 : vector<16x16xf32>
    %67 = math.exp %66 : vector<16x16xf32>
    %cst_23 = arith.constant dense<0.000000e+00> : vector<16xf32>
    %68 = vector.multi_reduction <add>, %67, %cst_23 [1] : vector<16x16xf32> to vector<16xf32>
    %69 = vector.shape_cast %68 : vector<16xf32> to vector<16x1xf32>
    %70 = vector.broadcast %69 : vector<16x1xf32> to vector<16x16xf32>
    %71 = arith.divf %67, %70 : vector<16x16xf32>
    %72 = arith.truncf %71 : vector<16x16xf32> to vector<16x16xbf16>
    %cst_24 = arith.constant dense<0.000000e+00> : vector<16x32xf32>
    %73 = tpu.matmul %72, %58, %cst_24 {dimension_numbers = #tpu.dot_dimension_numbers<[1], [0], [0], [1], [0, 0, 1, 1], [], []>} : vector<16x16xbf16>, vector<16x32xbf16>, vector<16x32xf32> -> vector<16x32xf32>
    %74 = vector.extract_strided_slice %31 {offsets = [0, 64], sizes = [16, 32], strides = [1, 1]} : vector<16x384xf32> to vector<16x32xf32>
    %75 = arith.truncf %74 : vector<16x32xf32> to vector<16x32xbf16>
    %76 = vector.extract_strided_slice %31 {offsets = [0, 192], sizes = [16, 32], strides = [1, 1]} : vector<16x384xf32> to vector<16x32xf32>
    %77 = arith.truncf %76 : vector<16x32xf32> to vector<16x32xbf16>
    %78 = vector.extract_strided_slice %31 {offsets = [0, 320], sizes = [16, 32], strides = [1, 1]} : vector<16x384xf32> to vector<16x32xf32>
    %79 = arith.truncf %78 : vector<16x32xf32> to vector<16x32xbf16>
    %80 = tpu.transpose %77, [1, 0] : vector<16x32xbf16> -> vector<32x16xbf16>
    %cst_25 = arith.constant dense<0.000000e+00> : vector<16x16xf32>
    %81 = tpu.matmul %75, %80, %cst_25 {dimension_numbers = #tpu.dot_dimension_numbers<[1], [0], [0], [1], [0, 0, 1, 1], [], []>} : vector<16x32xbf16>, vector<32x16xbf16>, vector<16x16xf32> -> vector<16x16xf32>
    %cst_26 = arith.constant 0.176776692 : f32
    %82 = vector.broadcast %cst_26 : f32 to vector<16x16xf32>
    %83 = arith.mulf %81, %82 : vector<16x16xf32>
    %cst_27 = arith.constant dense<0xFF800000> : vector<16xf32>
    %84 = vector.multi_reduction <maximumf>, %83, %cst_27 [1] : vector<16x16xf32> to vector<16xf32>
    %85 = vector.shape_cast %84 : vector<16xf32> to vector<16x1xf32>
    %86 = vector.broadcast %85 : vector<16x1xf32> to vector<16x16xf32>
    %87 = arith.subf %83, %86 : vector<16x16xf32>
    %88 = math.exp %87 : vector<16x16xf32>
    %cst_28 = arith.constant dense<0.000000e+00> : vector<16xf32>
    %89 = vector.multi_reduction <add>, %88, %cst_28 [1] : vector<16x16xf32> to vector<16xf32>
    %90 = vector.shape_cast %89 : vector<16xf32> to vector<16x1xf32>
    %91 = vector.broadcast %90 : vector<16x1xf32> to vector<16x16xf32>
    %92 = arith.divf %88, %91 : vector<16x16xf32>
    %93 = arith.truncf %92 : vector<16x16xf32> to vector<16x16xbf16>
    %cst_29 = arith.constant dense<0.000000e+00> : vector<16x32xf32>
    %94 = tpu.matmul %93, %79, %cst_29 {dimension_numbers = #tpu.dot_dimension_numbers<[1], [0], [0], [1], [0, 0, 1, 1], [], []>} : vector<16x16xbf16>, vector<16x32xbf16>, vector<16x32xf32> -> vector<16x32xf32>
    %95 = vector.extract_strided_slice %31 {offsets = [0, 96], sizes = [16, 32], strides = [1, 1]} : vector<16x384xf32> to vector<16x32xf32>
    %96 = arith.truncf %95 : vector<16x32xf32> to vector<16x32xbf16>
    %97 = vector.extract_strided_slice %31 {offsets = [0, 224], sizes = [16, 32], strides = [1, 1]} : vector<16x384xf32> to vector<16x32xf32>
    %98 = arith.truncf %97 : vector<16x32xf32> to vector<16x32xbf16>
    %99 = vector.extract_strided_slice %31 {offsets = [0, 352], sizes = [16, 32], strides = [1, 1]} : vector<16x384xf32> to vector<16x32xf32>
    %100 = arith.truncf %99 : vector<16x32xf32> to vector<16x32xbf16>
    %101 = tpu.transpose %98, [1, 0] : vector<16x32xbf16> -> vector<32x16xbf16>
    %cst_30 = arith.constant dense<0.000000e+00> : vector<16x16xf32>
    %102 = tpu.matmul %96, %101, %cst_30 {dimension_numbers = #tpu.dot_dimension_numbers<[1], [0], [0], [1], [0, 0, 1, 1], [], []>} : vector<16x32xbf16>, vector<32x16xbf16>, vector<16x16xf32> -> vector<16x16xf32>
    %cst_31 = arith.constant 0.176776692 : f32
    %103 = vector.broadcast %cst_31 : f32 to vector<16x16xf32>
    %104 = arith.mulf %102, %103 : vector<16x16xf32>
    %cst_32 = arith.constant dense<0xFF800000> : vector<16xf32>
    %105 = vector.multi_reduction <maximumf>, %104, %cst_32 [1] : vector<16x16xf32> to vector<16xf32>
    %106 = vector.shape_cast %105 : vector<16xf32> to vector<16x1xf32>
    %107 = vector.broadcast %106 : vector<16x1xf32> to vector<16x16xf32>
    %108 = arith.subf %104, %107 : vector<16x16xf32>
    %109 = math.exp %108 : vector<16x16xf32>
    %cst_33 = arith.constant dense<0.000000e+00> : vector<16xf32>
    %110 = vector.multi_reduction <add>, %109, %cst_33 [1] : vector<16x16xf32> to vector<16xf32>
    %111 = vector.shape_cast %110 : vector<16xf32> to vector<16x1xf32>
    %112 = vector.broadcast %111 : vector<16x1xf32> to vector<16x16xf32>
    %113 = arith.divf %109, %112 : vector<16x16xf32>
    %114 = arith.truncf %113 : vector<16x16xf32> to vector<16x16xbf16>
    %cst_34 = arith.constant dense<0.000000e+00> : vector<16x32xf32>
    %115 = tpu.matmul %114, %100, %cst_34 {dimension_numbers = #tpu.dot_dimension_numbers<[1], [0], [0], [1], [0, 0, 1, 1], [], []>} : vector<16x16xbf16>, vector<16x32xbf16>, vector<16x32xf32> -> vector<16x32xf32>
    %116 = tpu.concatenate %52, %73, %94, %115 in 1 : vector<16x32xf32>, vector<16x32xf32>, vector<16x32xf32>, vector<16x32xf32> -> vector<16x128xf32>
    %117 = arith.truncf %116 : vector<16x128xf32> to vector<16x128xbf16>
    %c0_35 = arith.constant 0 : index
    %c0_36 = arith.constant 0 : index
    %118 = vector.load %arg6[%c0_35, %c0_36] : memref<128x128xbf16, #tpu.memory_space<vmem>>, vector<128x128xbf16>
    %cst_37 = arith.constant dense<0.000000e+00> : vector<16x128xf32>
    %119 = tpu.matmul %117, %118, %cst_37 {dimension_numbers = #tpu.dot_dimension_numbers<[1], [0], [0], [1], [0, 0, 1, 1], [], []>} : vector<16x128xbf16>, vector<128x128xbf16>, vector<16x128xf32> -> vector<16x128xf32>
    %c0_38 = arith.constant 0 : index
    %c0_39 = arith.constant 0 : index
    %120 = vector.load %arg7[%c0_38, %c0_39] : memref<1x128xf32, #tpu.memory_space<vmem>>, vector<1x128xf32>
    %121 = vector.broadcast %120 : vector<1x128xf32> to vector<16x128xf32>
    %122 = arith.addf %119, %121 : vector<16x128xf32>
    %123 = arith.addf %1, %122 : vector<16x128xf32>
    %c0_40 = arith.constant 0 : index
    %c0_41 = arith.constant 0 : index
    %c0_42 = arith.constant 0 : index
    %124 = vector.load %arg8[%c0_40, %c0_41, %c0_42] : memref<1x16x128xf32, #tpu.memory_space<vmem>>, vector<1x16x128xf32>
    %125 = vector.shape_cast %124 : vector<1x16x128xf32> to vector<16x128xf32>
    %126 = vector.shape_cast %123 : vector<16x128xf32> to vector<1x16x128xf32>
    tpu.vector_store %arg8[%c0_40, %c0_41, %c0_42], %126 {strides = array<i32>} : memref<1x16x128xf32, #tpu.memory_space<vmem>>, vector<1x16x128xf32>,
    return
  }
  func.func @transform_0(%arg0: i32) -> (i32, i32, i32) {
    %c0_i32 = arith.constant 0 : i32
    %c0_i32_0 = arith.constant 0 : i32
    %c0_i32_1 = arith.constant 0 : i32
    return %arg0, %c0_i32, %c0_i32_0 : i32, i32, i32
  }
  func.func @transform_1(%arg0: i32) -> (i32, i32) {
    %c0_i32 = arith.constant 0 : i32
    %c0_i32_0 = arith.constant 0 : i32
    %c0_i32_1 = arith.constant 0 : i32
    return %c0_i32, %c0_i32_0 : i32, i32
  }
  func.func @transform_2(%arg0: i32) -> (i32, i32) {
    %c0_i32 = arith.constant 0 : i32
    %c0_i32_0 = arith.constant 0 : i32
    %c0_i32_1 = arith.constant 0 : i32
    return %c0_i32, %c0_i32_0 : i32, i32
  }
  func.func @transform_3(%arg0: i32) -> (i32, i32) {
    %c0_i32 = arith.constant 0 : i32
    %c0_i32_0 = arith.constant 0 : i32
    %c0_i32_1 = arith.constant 0 : i32
    return %c0_i32, %c0_i32_0 : i32, i32
  }
  func.func @transform_4(%arg0: i32) -> (i32, i32) {
    %c0_i32 = arith.constant 0 : i32
    %c0_i32_0 = arith.constant 0 : i32
    %c0_i32_1 = arith.constant 0 : i32
    return %c0_i32, %c0_i32_0 : i32, i32
  }
  func.func @transform_5(%arg0: i32) -> (i32, i32) {
    %c0_i32 = arith.constant 0 : i32
    %c0_i32_0 = arith.constant 0 : i32
    %c0_i32_1 = arith.constant 0 : i32
    return %c0_i32, %c0_i32_0 : i32, i32
  }
  func.func @transform_6(%arg0: i32) -> (i32, i32) {
    %c0_i32 = arith.constant 0 : i32
    %c0_i32_0 = arith.constant 0 : i32
    %c0_i32_1 = arith.constant 0 : i32
    return %c0_i32, %c0_i32_0 : i32, i32
  }
  func.func @transform_7(%arg0: i32) -> (i32, i32, i32) {
    %c0_i32 = arith.constant 0 : i32
    %c0_i32_0 = arith.constant 0 : i32
    %c0_i32_1 = arith.constant 0 : i32
    return %arg0, %c0_i32, %c0_i32_0 : i32, i32, i32
  }
}

</mosaic_0001>

<llo_original>
// kernel: tpu_custom_call.1
$region0: #{tpu_custom_call.1}
  #allocation0 [shape = 'u32[]', space=smem, size = 0x4, offset = 0x4, fixed_abs, tag = 'smem constant byte address 0x4 - core index']
  #allocation1 [shape = 'u32[144,128]{1,0:T(1,128)}', space=vmem, size = 0x12000, scoped, tag = 'internal scratch']
  %s0 = inlined_call_operand.hbm [shape: f32[2,16,128], index: 0, kind: input, shape index: {}]
  %s1 = inlined_call_operand.vmem [shape: f32[1,128], index: 1, kind: input, shape index: {}]
  %s2 = inlined_call_operand.vmem [shape: f32[1,128], index: 2, kind: input, shape index: {}]
  %s3 = inlined_call_operand.hbm [shape: bf16[128,384], index: 3, kind: input, shape index: {}]
  %s4 = inlined_call_operand.vmem [shape: f32[1,384], index: 4, kind: input, shape index: {}]
  %s5 = inlined_call_operand.hbm [shape: bf16[128,128], index: 5, kind: input, shape index: {}]
  %s6 = inlined_call_operand.vmem [shape: f32[1,128], index: 6, kind: input, shape index: {}]
  %s7 = inlined_call_operand.hbm [shape: f32[2,16,128], index: 7, kind: output, shape index: {}]
  %s8 = sld [smem:[#allocation0]]
  $region73: #{tpu_custom_call.1} parent=0
    _
  %s10 = ssub.s32 1, %s8
  %s11 = scalar_select 0, %s10, %s8
  $region1: #{tpu_custom_call.1} parent=0
    #allocation2 [shape = 'u8[16384]{0}', space=vmem, size = 0x4000, scoped, tag = 'input window, operand 0']
    #allocation3 [shape = 's32[2]{0}', space=sflag, size = 0x8, scoped, tag = 'scoped memory for tpu_custom_call.1']
    #allocation4 [shape = 's32[2]{0}', space=sflag, size = 0x8, scoped, tag = 'scoped memory for tpu_custom_call.1']
    #allocation5 [shape = 'u8[98304]{0}', space=vmem, size = 0x18000, scoped, tag = 'input window, operand 3, single buffered']
    #allocation6 [shape = 's32[1]{0}', space=sflag, size = 0x4, scoped, tag = 'scoped memory for tpu_custom_call.1']
    #allocation7 [shape = 'u8[32768]{0}', space=vmem, size = 0x8000, scoped, tag = 'input window, operand 5, single buffered']
    #allocation8 [shape = 'u8[16384]{0}', space=vmem, size = 0x4000, scoped, tag = 'output window, operand 0']
    %12 = vsyncpa [#allocation3], 0
    %s13 = scalar_lea.sflag [#allocation3], 1
    %14 = vsyncpa %s13, 0
    %15 = vsyncpa [#allocation6], 0
    %16 = vsyncpa [#allocation4], 0
    %s17 = scalar_lea.sflag [#allocation4], 1
    %18 = vsyncpa %s17, 0
    loop: start=0, step=1, limit=4
    $region2: #{tpu_custom_call.1} parent=1 // loop_pre_header
      _
    $region3: #{tpu_custom_call.1} parent=1 // loop_header
      %s20 = sphi 0, %s24
      %p21 = scmp.ge.s32.totalorder %s20, 4
      %s30 = sphi 0, %s32
      %s33 = sphi 0, %s30
      %s34 = sphi 0, %s33
      %s50 = sphi 0, %s34
      %s54 = sphi 0, %s54
      %s56 = sphi 0, %s54
      %s57 = sphi 0, %s56
      %s71 = sphi 0, %s57
      %s75 = sphi 0, %s75
      %s77 = sphi 0, %s75
      %s78 = sphi 0, %s77
      %s92 = sphi 0, %s78
      %s96 = sphi 0, %s96
      %s98 = sphi 0, %s96
      %s99 = sphi 0, %s98
      %s113 = sphi 0, %s99
      %s117 = sphi 0, %s117
      %s119 = sphi 0, %s117
      %s120 = sphi 0, %s119
      %s134 = sphi 0, %s120
      %s138 = sphi 0, %s138
      %s140 = sphi 0, %s138
      %s141 = sphi 0, %s140
      %s155 = sphi 0, %s141
      %s159 = sphi 0, %s159
      %s161 = sphi 0, %s159
      %s162 = sphi 0, %s161
      %s176 = sphi 0, %s162
      %s182 = sphi 0, %s184
      %s185 = sphi 0, %s182
      %s186 = sphi 0, %s185
      %s202 = sphi 0, %s186
    $region4: #{tpu_custom_call.1} parent=1 // loop_header_branch
      %23 = sbr.rel (%p21) target = $region8
    $region5: #{tpu_custom_call.1} parent=1 // loop_body
      %s25 = ssub.s32 %s20, 1
      %s26 = ssub.s32 %s20, 2
      %s27 = sadd.s32 %s20, 1
      %s28 = ssub.s32 %s20, %s27
      %p29 = scmp.eq.s32.totalorder %s28, 0
      %s31 = sadd.s32 %s30, 1
      %s32 = scalar_select %p29, %s30, %s31
      %p35 = pneg %p29
      %p36 = scmp.eq.s32.totalorder %s20, 1
      %p37 = por %p35, %p36
      %p38 = scmp.ne.s32.totalorder %s30, %s33
      %p39 = scmp.eq.s32.totalorder %s20, 0
      %p40 = por %p38, %p39
      %p41 = scmp.ne.s32.totalorder %s30, %s33
      %p42 = scmp.eq.s32.totalorder %s25, 1
      %p43 = por %p41, %p42
      %p44 = scmp.ne.s32.totalorder %s33, %s34
      %p45 = scmp.eq.s32.totalorder %s25, 0
      %p46 = por %p44, %p45
      %p47 = scmp.ne.s32.totalorder %s33, %s34
      %p48 = scmp.eq.s32.totalorder %s26, 1
      %p49 = por %p47, %p48
      %p51 = scmp.ne.s32.totalorder %s34, %s50
      %p52 = scmp.eq.s32.totalorder %s26, 0
      %p53 = por %p51, %p52
      %s55 = sadd.s32 %s54, 1
      %p58 = scmp.eq.s32.totalorder %s20, 1
      %p59 = scmp.ne.s32.totalorder %s54, %s56
      %p60 = scmp.eq.s32.totalorder %s20, 0
      %p61 = por %p59, %p60
      %p62 = scmp.ne.s32.totalorder %s54, %s56
      %p63 = scmp.eq.s32.totalorder %s25, 1
      %p64 = por %p62, %p63
      %p65 = scmp.ne.s32.totalorder %s56, %s57
      %p66 = scmp.eq.s32.totalorder %s25, 0
      %p67 = por %p65, %p66
      %p68 = scmp.ne.s32.totalorder %s56, %s57
      %p69 = scmp.eq.s32.totalorder %s26, 1
      %p70 = por %p68, %p69
      %p72 = scmp.ne.s32.totalorder %s57, %s71
      %p73 = scmp.eq.s32.totalorder %s26, 0
      %p74 = por %p72, %p73
      %s76 = sadd.s32 %s75, 1
      %p79 = scmp.eq.s32.totalorder %s20, 1
      %p80 = scmp.ne.s32.totalorder %s75, %s77
      %p81 = scmp.eq.s32.totalorder %s20, 0
      %p82 = por %p80, %p81
      %p83 = scmp.ne.s32.totalorder %s75, %s77
      %p84 = scmp.eq.s32.totalorder %s25, 1
      %p85 = por %p83, %p84
      %p86 = scmp.ne.s32.totalorder %s77, %s78
      %p87 = scmp.eq.s32.totalorder %s25, 0
      %p88 = por %p86, %p87
      %p89 = scmp.ne.s32.totalorder %s77, %s78
      %p90 = scmp.eq.s32.totalorder %s26, 1
      %p91 = por %p89, %p90
      %p93 = scmp.ne.s32.totalorder %s78, %s92
      %p94 = scmp.eq.s32.totalorder %s26, 0
      %p95 = por %p93, %p94
      %s97 = sadd.s32 %s96, 1
      %p100 = scmp.eq.s32.totalorder %s20, 1
      %p101 = scmp.ne.s32.totalorder %s96, %s98
      %p102 = scmp.eq.s32.totalorder %s20, 0
      %p103 = por %p101, %p102
      %p104 = scmp.ne.s32.totalorder %s96, %s98
      %p105 = scmp.eq.s32.totalorder %s25, 1
      %p106 = por %p104, %p105
      %p107 = scmp.ne.s32.totalorder %s98, %s99
      %p108 = scmp.eq.s32.totalorder %s25, 0
      %p109 = por %p107, %p108
      %p110 = scmp.ne.s32.totalorder %s98, %s99
      %p111 = scmp.eq.s32.totalorder %s26, 1
      %p112 = por %p110, %p111
      %p114 = scmp.ne.s32.totalorder %s99, %s113
      %p115 = scmp.eq.s32.totalorder %s26, 0
      %p116 = por %p114, %p115
      %s118 = sadd.s32 %s117, 1
      %p121 = scmp.eq.s32.totalorder %s20, 1
      %p122 = scmp.ne.s32.totalorder %s117, %s119
      %p123 = scmp.eq.s32.totalorder %s20, 0
      %p124 = por %p122, %p123
      %p125 = scmp.ne.s32.totalorder %s117, %s119
      %p126 = scmp.eq.s32.totalorder %s25, 1
      %p127 = por %p125, %p126
      %p128 = scmp.ne.s32.totalorder %s119, %s120
      %p129 = scmp.eq.s32.totalorder %s25, 0
      %p130 = por %p128, %p129
      %p131 = scmp.ne.s32.totalorder %s119, %s120
      %p132 = scmp.eq.s32.totalorder %s26, 1
      %p133 = por %p131, %p132
      %p135 = scmp.ne.s32.totalorder %s120, %s134
      %p136 = scmp.eq.s32.totalorder %s26, 0
      %p137 = por %p135, %p136
      %s139 = sadd.s32 %s138, 1
      %p142 = scmp.eq.s32.totalorder %s20, 1
      %p143 = scmp.ne.s32.totalorder %s138, %s140
      %p144 = scmp.eq.s32.totalorder %s20, 0
      %p145 = por %p143, %p144
      %p146 = scmp.ne.s32.totalorder %s138, %s140
      %p147 = scmp.eq.s32.totalorder %s25, 1
      %p148 = por %p146, %p147
      %p149 = scmp.ne.s32.totalorder %s140, %s141
      %p150 = scmp.eq.s32.totalorder %s25, 0
      %p151 = por %p149, %p150
      %p152 = scmp.ne.s32.totalorder %s140, %s141
      %p153 = scmp.eq.s32.totalorder %s26, 1
      %p154 = por %p152, %p153
      %p156 = scmp.ne.s32.totalorder %s141, %s155
      %p157 = scmp.eq.s32.totalorder %s26, 0
      %p158 = por %p156, %p157
      %s160 = sadd.s32 %s159, 1
      %p163 = scmp.eq.s32.totalorder %s20, 1
      %p164 = scmp.ne.s32.totalorder %s159, %s161
      %p165 = scmp.eq.s32.totalorder %s20, 0
      %p166 = por %p164, %p165
      %p167 = scmp.ne.s32.totalorder %s159, %s161
      %p168 = scmp.eq.s32.totalorder %s25, 1
      %p169 = por %p167, %p168
      %p170 = scmp.ne.s32.totalorder %s161, %s162
      %p171 = scmp.eq.s32.totalorder %s25, 0
      %p172 = por %p170, %p171
      %p173 = scmp.ne.s32.totalorder %s161, %s162
      %p174 = scmp.eq.s32.totalorder %s26, 1
      %p175 = por %p173, %p174
      %p177 = scmp.ne.s32.totalorder %s162, %s176
      %p178 = scmp.eq.s32.totalorder %s26, 0
      %p179 = por %p177, %p178
      %s180 = ssub.s32 %s20, %s27
      %p181 = scmp.eq.s32.totalorder %s180, 0
      %s183 = sadd.s32 %s182, 1
      %s184 = scalar_select %p181, %s182, %s183
      %p187 = pneg %p181
      %p188 = scmp.eq.s32.totalorder %s20, 1
      %p189 = por %p187, %p188
      %p190 = scmp.ne.s32.totalorder %s182, %s185
      %p191 = scmp.eq.s32.totalorder %s20, 0
      %p192 = por %p190, %p191
      %p193 = scmp.ne.s32.totalorder %s182, %s185
      %p194 = scmp.eq.s32.totalorder %s25, 1
      %p195 = por %p193, %p194
      %p196 = scmp.ne.s32.totalorder %s185, %s186
      %p197 = scmp.eq.s32.totalorder %s25, 0
      %p198 = por %p196, %p197
      %p199 = scmp.ne.s32.totalorder %s185, %s186
      %p200 = scmp.eq.s32.totalorder %s26, 1
      %p201 = por %p199, %p200
      %p203 = scmp.ne.s32.totalorder %s186, %s202
      %p204 = scmp.eq.s32.totalorder %s26, 0
      %p205 = por %p203, %p204
      %p206 = scmp.le.s32.totalorder 1, %s20
      %p207 = scmp.lt.s32.totalorder %s20, 3
      %p208 = pnand %p206, %p207
      %p209 = pneg %p208
      // Predicated region
      $region9: #{tpu_custom_call.1} parent=5 // pred_check
        _
      $region10: #{tpu_custom_call.1} parent=5 // pred_check_branch
        %211 = sbr.rel (%p208) target = $region12
      $region11: #{tpu_custom_call.1} parent=5 // pred_region
        %s212 = ssub.s32 %s20, 1
        // Predicated region
        $region13: #{tpu_custom_call.1} parent=11 // pred_check
          %p213 = pneg %p67
        $region14: #{tpu_custom_call.1} parent=11 // pred_check_branch
          %215 = sbr.rel (%p213) target = $region16
        $region15: #{tpu_custom_call.1} parent=11 // pred_region
          _
        $region16: #{tpu_custom_call.1} parent=11 // pred_fallthru
          _
        // Predicated region
        $region17: #{tpu_custom_call.1} parent=11 // pred_check
          %p216 = pneg %p88
        $region18: #{tpu_custom_call.1} parent=11 // pred_check_branch
          %218 = sbr.rel (%p216) target = $region20
        $region19: #{tpu_custom_call.1} parent=11 // pred_region
          _
        $region20: #{tpu_custom_call.1} parent=11 // pred_fallthru
          _
        // Predicated region
        $region21: #{tpu_custom_call.1} parent=11 // pred_check
          %p219 = pneg %p109
        $region22: #{tpu_custom_call.1} parent=11 // pred_check_branch
          %221 = sbr.rel (%p219) target = $region24
        $region23: #{tpu_custom_call.1} parent=11 // pred_region
          %s223 = ssub.s32 3072, 3072
          %224 = vsyncadd [#allocation6], %s223
          %s225 = sshll.u32 [#allocation5], 4
          %s226 = int_to_ptr.vmem [resolvable:$true] %s225
          %231 = dma.hbm_to_vmem [thread:$0]  %s3, 3072, %s226, [#allocation6], 192, 192, 12
        $region24: #{tpu_custom_call.1} parent=11 // pred_fallthru
          _
        // Predicated region
        $region25: #{tpu_custom_call.1} parent=11 // pred_check
          %p232 = pneg %p130
        $region26: #{tpu_custom_call.1} parent=11 // pred_check_branch
          %234 = sbr.rel (%p232) target = $region28
        $region27: #{tpu_custom_call.1} parent=11 // pred_region
          _
        $region28: #{tpu_custom_call.1} parent=11 // pred_fallthru
          _
        // Predicated region
        $region29: #{tpu_custom_call.1} parent=11 // pred_check
          %p235 = pneg %p151
        $region30: #{tpu_custom_call.1} parent=11 // pred_check_branch
          %237 = sbr.rel (%p235) target = $region32
        $region31: #{tpu_custom_call.1} parent=11 // pred_region
          %s239 = ssub.s32 1024, 1024
          %240 = vsyncadd [#allocation6], %s239
          %s241 = sshll.u32 [#allocation7], 4
          %s242 = int_to_ptr.vmem [resolvable:$true] %s241
          %247 = dma.hbm_to_vmem [thread:$0]  %s5, 1024, %s242, [#allocation6], 64, 64, 4
        $region32: #{tpu_custom_call.1} parent=11 // pred_fallthru
          _
        // Predicated region
        $region33: #{tpu_custom_call.1} parent=11 // pred_check
          %p248 = pneg %p172
        $region34: #{tpu_custom_call.1} parent=11 // pred_check_branch
          %250 = sbr.rel (%p248) target = $region36
        $region35: #{tpu_custom_call.1} parent=11 // pred_region
          _
        $region36: #{tpu_custom_call.1} parent=11 // pred_fallthru
          _
      $region12: #{tpu_custom_call.1} parent=5 // pred_fallthru
        _
      %p251 = scmp.lt.s32.totalorder %s20, 2
      // Predicated region
      $region37: #{tpu_custom_call.1} parent=5 // pred_check
        %p252 = pneg %p251
      $region38: #{tpu_custom_call.1} parent=5 // pred_check_branch
        %254 = sbr.rel (%p252) target = $region40
      $region39: #{tpu_custom_call.1} parent=5 // pred_region
        // Predicated region
        $region41: #{tpu_custom_call.1} parent=39 // pred_check
          %p255 = pneg %p40
        $region42: #{tpu_custom_call.1} parent=39 // pred_check_branch
          %257 = sbr.rel (%p255) target = $region44
        $region43: #{tpu_custom_call.1} parent=39 // pred_region
          %s258 = sand.u32 %s30, 1
          %s259 = scalar_lea.sflag [#allocation3], %s258
          %s260 = sand.u32 %s30, 1
          %s261 = smul.addr %s260, 16
          %s262 = scalar_lea.vmem [#allocation2], %s261
          %s264 = ssub.s32 256, 256
          %265 = vsyncadd %s259, %s264
          %s266 = smul.addr %s20, 2
          %s267 = smul.addr %s266, 128
          %s268 = scalar_lea.hbm %s0, %s267
          %s269 = sshll.u32 %s262, 4
          %s270 = int_to_ptr.vmem [resolvable:$true] %s269
          %275 = dma.hbm_to_vmem [thread:$0]  %s268, 256, %s270, %s259, 128, 128, 8
        $region44: #{tpu_custom_call.1} parent=39 // pred_fallthru
          _
      $region40: #{tpu_custom_call.1} parent=5 // pred_fallthru
        _
      %p276 = scmp.le.s32.totalorder 1, %s20
      %p277 = scmp.lt.s32.totalorder %s20, 3
      %p278 = pnand %p276, %p277
      %p279 = pneg %p278
      // Predicated region
      $region45: #{tpu_custom_call.1} parent=5 // pred_check
        _
      $region46: #{tpu_custom_call.1} parent=5 // pred_check_branch
        %281 = sbr.rel (%p278) target = $region48
      $region47: #{tpu_custom_call.1} parent=5 // pred_region
        %s282 = ssub.s32 %s20, 1
        %s283 = sand.u32 %s33, 1
        %s284 = scalar_lea.sflag [#allocation3], %s283
        %s285 = sand.u32 %s33, 1
        %s286 = smul.addr %s285, 16
        %s287 = scalar_lea.vmem [#allocation2], %s286
        // Predicated region
        $region49: #{tpu_custom_call.1} parent=47 // pred_check
          %p288 = pneg %p46
        $region50: #{tpu_custom_call.1} parent=47 // pred_check_branch
          %290 = sbr.rel (%p288) target = $region52
        $region51: #{tpu_custom_call.1} parent=47 // pred_region
          %291 = dma.done %s284, 256
        $region52: #{tpu_custom_call.1} parent=47 // pred_fallthru
          _
        // Predicated region
        $region53: #{tpu_custom_call.1} parent=47 // pred_check
          %p292 = pneg %p109
        $region54: #{tpu_custom_call.1} parent=47 // pred_check_branch
          %294 = sbr.rel (%p292) target = $region56
        $region55: #{tpu_custom_call.1} parent=47 // pred_region
          %295 = dma.done [#allocation6], 3072
        $region56: #{tpu_custom_call.1} parent=47 // pred_fallthru
          _
        // Predicated region
        $region57: #{tpu_custom_call.1} parent=47 // pred_check
          %p296 = pneg %p151
        $region58: #{tpu_custom_call.1} parent=47 // pred_check_branch
          %298 = sbr.rel (%p296) target = $region60
        $region59: #{tpu_custom_call.1} parent=47 // pred_region
          %299 = dma.done [#allocation6], 1024
        $region60: #{tpu_custom_call.1} parent=47 // pred_fallthru
          _
        %s300 = sand.u32 %s33, 1
        %s301 = scalar_lea.sflag [#allocation3], %s300
        %s302 = sand.u32 %s33, 1
        %s303 = smul.addr %s302, 16
        %s304 = scalar_lea.vmem [#allocation2], %s303
        %p305 = pneg %p46
        %p306 = pneg %p43
        %p307 = pneg %p67
        %p308 = pneg %p64
        %p309 = pneg %p88
        %p310 = pneg %p85
        %p311 = pneg %p109
        %p312 = pneg %p106
        %p313 = pneg %p130
        %p314 = pneg %p127
        %p315 = pneg %p151
        %p316 = pneg %p148
        %p317 = pneg %p172
        %p318 = pneg %p169
        %p319 = pneg %p198
        %p320 = pneg %p195
        %s321 = sand.u32 %s185, 1
        %s322 = scalar_lea.sflag [#allocation4], %s321
        %s323 = sand.u32 %s185, 1
        %s324 = smul.addr %s323, 16
        %s325 = scalar_lea.vmem [#allocation8], %s324
        %v327 = vld [vmem:[%s287] sm:$0xff]
        %v328 = vld [vmem:[%s287 + $0x8] sm:$0xff]
        %v329 = vld [vmem:[%s1] sm:$0x1]
        %v330 = vld [vmem:[%s2] sm:$0x1]
        %331 = vadd.xlane.f32.xlu0 %v327
        %v332 = vpop.xlane.xlu0 %331
        %333 = vadd.xlane.f32.xlu0 %v328
        %v334 = vpop.xlane.xlu0 %333
        %v335 = vrcp.pop 128.0
        %v336 = vmul.f32 %v332, %v335
        %v337 = vmul.f32 %v334, %v335
        %v338 = vsub.f32 %v327, %v336
        %v339 = vsub.f32 %v328, %v337
        %v340 = vmul.f32 %v338, %v338
        %v341 = vmul.f32 %v339, %v339
        %342 = vadd.xlane.f32.xlu0 %v340
        %v343 = vpop.xlane.xlu0 %342
        %344 = vadd.xlane.f32.xlu0 %v341
        %v345 = vpop.xlane.xlu0 %344
        %v346 = vmul.f32 %v343, %v335
        %v347 = vmul.f32 %v345, %v335
        %v348 = vadd.f32 %v346, 1e-05
        %v349 = vadd.f32 %v347, 1e-05
        %v350 = vrsqrt.pop %v348
        %v351 = vrsqrt.pop %v349
        %v352 = vmul.f32 %v338, %v350
        %v353 = vmul.f32 %v339, %v351
        %v355 = vlaneseq
        %v356 = vshrl.u32 %v355, 7
        %v357 = vsub.s32 0, %v356
        %v358 = vrot.slane %v329, %v357
        %v360 = vmul.f32 %v352, %v358
        %v361 = vmul.f32 %v353, %v358
        %v363 = vlaneseq
        %v364 = vshrl.u32 %v363, 7
        %v365 = vsub.s32 0, %v364
        %v366 = vrot.slane %v330, %v365
        %v368 = vadd.f32 %v360, %v366
        %v369 = vadd.f32 %v361, %v366
        %v370 = vpack.c.bf16 %v369, %v368
        %v371 = vld [vmem:[#allocation5] sm:$0xff]
        %v372 = vld [vmem:[#allocation5 + $0x8] sm:$0xf]
        %v373 = vld [vmem:[#allocation5 + $0xc] sm:$0xff]
        %v374 = vld [vmem:[#allocation5 + $0x14] sm:$0xf]
        %v375 = vld [vmem:[#allocation5 + $0x18] sm:$0xff]
        %v376 = vld [vmem:[#allocation5 + $0x20] sm:$0xf]
        %v377 = vld [vmem:[#allocation5 + $0x24] sm:$0xff]
        %v378 = vld [vmem:[#allocation5 + $0x2c] sm:$0xf]
        %v379 = vld [vmem:[#allocation5 + $0x30] sm:$0xff]
        %v380 = vld [vmem:[#allocation5 + $0x38] sm:$0xf]
        %v381 = vld [vmem:[#allocation5 + $0x3c] sm:$0xff]
        %v382 = vld [vmem:[#allocation5 + $0x44] sm:$0xf]
        %v383 = vld [vmem:[#allocation5 + $0x48] sm:$0xff]
        %v384 = vld [vmem:[#allocation5 + $0x50] sm:$0xf]
        %v385 = vld [vmem:[#allocation5 + $0x54] sm:$0xff]
        %v386 = vld [vmem:[#allocation5 + $0x5c] sm:$0xf]
        %v387 = vld [vmem:[#allocation5 + $0x60] sm:$0xff]
        %v388 = vld [vmem:[#allocation5 + $0x68] sm:$0xf]
        %v389 = vld [vmem:[#allocation5 + $0x6c] sm:$0xff]
        %v390 = vld [vmem:[#allocation5 + $0x74] sm:$0xf]
        %v391 = vld [vmem:[#allocation5 + $0x78] sm:$0xff]
        %v392 = vld [vmem:[#allocation5 + $0x80] sm:$0xf]
        %v393 = vld [vmem:[#allocation5 + $0x84] sm:$0xff]
        %v394 = vld [vmem:[#allocation5 + $0x8c] sm:$0xf]
        %v395 = vld [vmem:[#allocation5 + $0x90] sm:$0xff]
        %v396 = vld [vmem:[#allocation5 + $0x98] sm:$0xf]
        %v397 = vld [vmem:[#allocation5 + $0x9c] sm:$0xff]
        %v398 = vld [vmem:[#allocation5 + $0xa4] sm:$0xf]
        %v399 = vld [vmem:[#allocation5 + $0xa8] sm:$0xff]
        %v400 = vld [vmem:[#allocation5 + $0xb0] sm:$0xf]
        %v401 = vld [vmem:[#allocation5 + $0xb4] sm:$0xff]
        %v402 = vld [vmem:[#allocation5 + $0xbc] sm:$0xf]
        %v403 = vld [vmem:[%s4] sm:$0x7]
        %v405 = vlaneseq
        %v406 = vshrl.u32 %v405, 7
        %v407 = vsub.s32 0, %v406
        %v408 = vrot.slane %v403, %v407
        %v409 = vlaneseq
        %v410 = vshrl.u32 %v409, 7
        %v411 = vsub.s32 1, %v410
        %v412 = vrot.slane %v403, %v411
        %v413 = vlaneseq
        %v414 = vshrl.u32 %v413, 7
        %v415 = vsub.s32 2, %v414
        %v416 = vrot.slane %v403, %v415
        %v452 = vunpack.c.l.b16 %v371
        %v453 = vunpack.c.h.b16 %v371
        %v454 = vunpack.c.l.b16 %v372
        %v455 = vunpack.c.l.b16 %v373
        %v456 = vunpack.c.h.b16 %v373
        %v457 = vunpack.c.l.b16 %v374
        %v458 = vunpack.c.l.b16 %v375
        %v459 = vunpack.c.h.b16 %v375
        %v460 = vunpack.c.l.b16 %v376
        %v461 = vunpack.c.l.b16 %v377
        %v462 = vunpack.c.h.b16 %v377
        %v463 = vunpack.c.l.b16 %v378
        %v464 = vunpack.c.l.b16 %v379
        %v465 = vunpack.c.h.b16 %v379
        %v466 = vunpack.c.l.b16 %v380
        %v467 = vunpack.c.l.b16 %v381
        %v468 = vunpack.c.h.b16 %v381
        %v469 = vunpack.c.l.b16 %v382
        %v470 = vunpack.c.l.b16 %v383
        %v471 = vunpack.c.h.b16 %v383
        %v472 = vunpack.c.l.b16 %v384
        %v473 = vunpack.c.l.b16 %v385
        %v474 = vunpack.c.h.b16 %v385
        %v475 = vunpack.c.l.b16 %v386
        %v476 = vunpack.c.l.b16 %v387
        %v477 = vunpack.c.h.b16 %v387
        %v478 = vunpack.c.l.b16 %v388
        %v479 = vunpack.c.l.b16 %v389
        %v480 = vunpack.c.h.b16 %v389
        %v481 = vunpack.c.l.b16 %v390
        %v482 = vunpack.c.l.b16 %v391
        %v483 = vunpack.c.h.b16 %v391
        %v484 = vunpack.c.l.b16 %v392
        %v485 = vunpack.c.l.b16 %v393
        %v486 = vunpack.c.h.b16 %v393
        %v487 = vunpack.c.l.b16 %v394
        %v488 = vunpack.c.l.b16 %v395
        %v489 = vunpack.c.h.b16 %v395
        %v490 = vunpack.c.l.b16 %v396
        %v491 = vunpack.c.l.b16 %v397
        %v492 = vunpack.c.h.b16 %v397
        %v493 = vunpack.c.l.b16 %v398
        %v494 = vunpack.c.l.b16 %v399
        %v495 = vunpack.c.h.b16 %v399
        %v496 = vunpack.c.l.b16 %v400
        %v497 = vunpack.c.l.b16 %v401
        %v498 = vunpack.c.h.b16 %v401
        %v499 = vunpack.c.l.b16 %v402
        %v500 = vpack.c.b16 %v455, %v452
        %v501 = vpack.c.b16 %v456, %v453
        %v502 = vpack.c.b16 %v457, %v454
        %v503 = vpack.c.b16 %v461, %v458
        %v504 = vpack.c.b16 %v462, %v459
        %v505 = vpack.c.b16 %v463, %v460
        %v506 = vpack.c.b16 %v467, %v464
        %v507 = vpack.c.b16 %v468, %v465
        %v508 = vpack.c.b16 %v469, %v466
        %v509 = vpack.c.b16 %v473, %v470
        %v510 = vpack.c.b16 %v474, %v471
        %v511 = vpack.c.b16 %v475, %v472
        %v512 = vpack.c.b16 %v479, %v476
        %v513 = vpack.c.b16 %v480, %v477
        %v514 = vpack.c.b16 %v481, %v478
        %v515 = vpack.c.b16 %v485, %v482
        %v516 = vpack.c.b16 %v486, %v483
        %v517 = vpack.c.b16 %v487, %v484
        %v518 = vpack.c.b16 %v491, %v488
        %v519 = vpack.c.b16 %v492, %v489
        %v520 = vpack.c.b16 %v493, %v490
        %v521 = vpack.c.b16 %v497, %v494
        %v522 = vpack.c.b16 %v498, %v495
        %v523 = vpack.c.b16 %v499, %v496
        %548 = vmatprep.subr.bf16.mxu0 %v522
        %549 = vmatpush1.bf16.msra.mxu0 %v521
        %550 = vmatprep.subr.bf16.mxu0 %v519
        %551 = vmatpush1.bf16.msra.mxu0 %v518
        %552 = vmatprep.subr.bf16.mxu0 %v516
        %553 = vmatpush1.bf16.msra.mxu0 %v515
        %554 = vmatprep.subr.bf16.mxu0 %v513
        %555 = vmatpush1.bf16.msra.mxu0 %v512
        %556 = vmatprep.subr.bf16.mxu0 %v510
        %557 = vmatpush1.bf16.msra.mxu0 %v509
        %558 = vmatprep.subr.bf16.mxu0 %v507
        %559 = vmatpush1.bf16.msra.mxu0 %v506
        %560 = vmatprep.subr.bf16.mxu0 %v504
        %561 = vmatpush1.bf16.msra.mxu0 %v503
        %562 = vmatprep.subr.bf16.mxu0 %v501
        %563 = vmatpush1.bf16.msra.mxu0 %v500
        %564 = vmatprep.subr.bf16.mxu0 0
        %565 = vmatpush2.bf16.msra.mxu0 0
        %566 = vmatprep.subr.bf16.mxu0 0
        %567 = vmatpush2.bf16.msra.mxu0 0
        %568 = vmatprep.subr.bf16.mxu0 0
        %569 = vmatpush2.bf16.msra.mxu0 0
        %570 = vmatprep.subr.bf16.mxu0 0
        %571 = vmatpush2.bf16.msra.mxu0 0
        %572 = vmatprep.subr.bf16.mxu0 0
        %573 = vmatpush2.bf16.msra.mxu0 0
        %574 = vmatprep.subr.bf16.mxu0 0
        %575 = vmatpush2.bf16.msra.mxu0 0
        %576 = vmatprep.subr.bf16.mxu0 0
        %577 = vmatpush2.bf16.msra.mxu0 0
        %578 = vmatprep.subr.bf16.mxu0 0
        %579 = vmatpush2.bf16.msra.mxu0 0
        %580 = vmatprep.mubr.bf16.mxu0 0
        %581 = vmatmul.mubr.bf16.gmra.mxu0 %v370
        %v582 = vpop.f32.mrf.mxu0
        %v583 = vadd.f32 %v408, %v582
        %v584 = vpop.f32.mrf.mxu0
        %v585 = vadd.f32 %v412, %v584
        %v586 = vpop.f32.mrf.mxu0
        %v587 = vadd.f32 %v408, %v586
        %v588 = vpop.f32.mrf.mxu0
        %v589 = vadd.f32 %v412, %v588
        %590 = vdwg.mxu0
        %591 = vmatprep.subr.bf16.mxu0 0
        %592 = vmatpush1.bf16.msra.mxu0 %v523
        %593 = vmatprep.subr.bf16.mxu0 0
        %594 = vmatpush1.bf16.msra.mxu0 %v520
        %595 = vmatprep.subr.bf16.mxu0 0
        %596 = vmatpush1.bf16.msra.mxu0 %v517
        %597 = vmatprep.subr.bf16.mxu0 0
        %598 = vmatpush1.bf16.msra.mxu0 %v514
        %599 = vmatprep.subr.bf16.mxu0 0
        %600 = vmatpush1.bf16.msra.mxu0 %v511
        %601 = vmatprep.subr.bf16.mxu0 0
        %602 = vmatpush1.bf16.msra.mxu0 %v508
        %603 = vmatprep.subr.bf16.mxu0 0
        %604 = vmatpush1.bf16.msra.mxu0 %v505
        %605 = vmatprep.subr.bf16.mxu0 0
        %606 = vmatpush1.bf16.msra.mxu0 %v502
        %607 = vmatprep.subr.bf16.mxu0 0
        %608 = vmatpush2.bf16.msra.mxu0 0
        %609 = vmatprep.subr.bf16.mxu0 0
        %610 = vmatpush2.bf16.msra.mxu0 0
        %611 = vmatprep.subr.bf16.mxu0 0
        %612 = vmatpush2.bf16.msra.mxu0 0
        %613 = vmatprep.subr.bf16.mxu0 0
        %614 = vmatpush2.bf16.msra.mxu0 0
        %615 = vmatprep.subr.bf16.mxu0 0
        %616 = vmatpush2.bf16.msra.mxu0 0
        %617 = vmatprep.subr.bf16.mxu0 0
        %618 = vmatpush2.bf16.msra.mxu0 0
        %619 = vmatprep.subr.bf16.mxu0 0
        %620 = vmatpush2.bf16.msra.mxu0 0
        %621 = vmatprep.subr.bf16.mxu0 0
        %622 = vmatpush2.bf16.msra.mxu0 0
        %623 = vmatprep.mubr.bf16.mxu0 0
        %624 = vmatmul.mubr.bf16.gmra.mxu0 %v370
        %v625 = vpop.f32.mrf.mxu0
        %v626 = vadd.f32 %v416, %v625
        %v627 = vpop.f32.mrf.mxu0
        %v628 = vpop.f32.mrf.mxu0
        %v629 = vadd.f32 %v416, %v628
        %v630 = vpop.f32.mrf.mxu0
        %631 = vdwg.mxu0
        %v632 = vpack.c.bf16 %v587, %v583
        %v633 = vpack.c.bf16 %v589, %v585
        %v634 = vpack.c.bf16 %v629, %v626
        %vm635 = vcmask 261120
        %v637 = vsel %vm635, %v632, 0
        %v640 = vsel %vm635, %v633, 0
        %642 = vmatprep.subr.bf16.mxu0 0
        %643 = vmatpush1.bf16.xpose.msra.mxu0 0
        %644 = vmatprep.subr.bf16.mxu0 0
        %645 = vmatpush1.bf16.xpose.msra.mxu0 0
        %646 = vmatprep.subr.bf16.mxu0 0
        %647 = vmatpush1.bf16.xpose.msra.mxu0 0
        %648 = vmatprep.subr.bf16.mxu0 0
        %649 = vmatpush1.bf16.xpose.msra.mxu0 0
        %650 = vmatprep.subr.bf16.mxu0 0
        %651 = vmatpush1.bf16.xpose.msra.mxu0 0
        %652 = vmatprep.subr.bf16.mxu0 0
        %653 = vmatpush1.bf16.xpose.msra.mxu0 0
        %654 = vmatprep.subr.bf16.mxu0 0
        %655 = vmatpush1.bf16.xpose.msra.mxu0 0
        %656 = vmatprep.subr.bf16.mxu0 0
        %657 = vmatpush1.bf16.xpose.msra.mxu0 %v640
        %658 = vmatprep.subr.bf16.mxu0 0
        %659 = vmatpush2.bf16.xpose.msra.mxu0 0
        %660 = vmatprep.subr.bf16.mxu0 0
        %661 = vmatpush2.bf16.xpose.msra.mxu0 0
        %662 = vmatprep.subr.bf16.mxu0 0
        %663 = vmatpush2.bf16.xpose.msra.mxu0 0
        %664 = vmatprep.subr.bf16.mxu0 0
        %665 = vmatpush2.bf16.xpose.msra.mxu0 0
        %666 = vmatprep.subr.bf16.mxu0 0
        %667 = vmatpush2.bf16.xpose.msra.mxu0 0
        %668 = vmatprep.subr.bf16.mxu0 0
        %669 = vmatpush2.bf16.xpose.msra.mxu0 0
        %670 = vmatprep.subr.bf16.mxu0 0
        %671 = vmatpush2.bf16.xpose.msra.mxu0 0
        %672 = vmatprep.subr.bf16.mxu0 0
        %673 = vmatpush2.bf16.xpose.msra.mxu0 0
        %674 = vmatprep.mubr.bf16.mxu0 0
        %675 = vmatmul.mubr.bf16.gmra.mxu0 %v637
        %v676 = vpop.f32.mrf.mxu0
        %v677 = vadd.f32 0.0, %v676
        %v678 = vpop.f32.mrf.mxu0
        %v679 = vpop.f32.mrf.mxu0
        %v680 = vadd.f32 0.0, %v679
        %v681 = vpop.f32.mrf.mxu0
        %682 = vdwg.mxu0
        %v683 = vmul.f32 %v677, 0.17677669
        %v684 = vmul.f32 %v680, 0.17677669
        %vm685 = vcmask 130048
        %v686 = vsel %vm685, %v683, -inf
        %687 = vmax.xlane.f32.xlu0 %v686
        %v688 = vpop.xlane.xlu0 %687
        %v689 = vsel %vm685, %v684, -inf
        %690 = vmax.xlane.f32.xlu0 %v689
        %v691 = vpop.xlane.xlu0 %690
        %v692 = vsub.f32 %v683, %v688
        %v693 = vsub.f32 %v684, %v691
        %v694 = vmul.f32 %v692, 1.442695
        %v695 = vpow.pop %v694
        %v696 = vmul.f32 %v693, 1.442695
        %v697 = vpow.pop %v696
        %v698 = vsel %vm685, %v695, 0.0
        %699 = vadd.xlane.f32.xlu0 %v698
        %v700 = vpop.xlane.xlu0 %699
        %v701 = vsel %vm685, %v697, 0.0
        %702 = vadd.xlane.f32.xlu0 %v701
        %v703 = vpop.xlane.xlu0 %702
        %v704 = vrcp.pop %v700
        %v705 = vmul.f32 %v695, %v704
        %v706 = vrcp.pop %v703
        %v707 = vmul.f32 %v697, %v706
        %v708 = vpack.c.bf16 %v707, %v705
        %v710 = vsel %vm685, %v708, 0
        %712 = vmatprep.subr.bf16.mxu0 0
        %713 = vmatpush1.bf16.msra.mxu0 0
        %714 = vmatprep.subr.bf16.mxu0 0
        %715 = vmatpush1.bf16.msra.mxu0 0
        %716 = vmatprep.subr.bf16.mxu0 0
        %717 = vmatpush1.bf16.msra.mxu0 0
        %718 = vmatprep.subr.bf16.mxu0 0
        %719 = vmatpush1.bf16.msra.mxu0 0
        %720 = vmatprep.subr.bf16.mxu0 0
        %721 = vmatpush1.bf16.msra.mxu0 0
        %722 = vmatprep.subr.bf16.mxu0 0
        %723 = vmatpush1.bf16.msra.mxu0 0
        %724 = vmatprep.subr.bf16.mxu0 0
        %725 = vmatpush1.bf16.msra.mxu0 0
        %726 = vmatprep.subr.bf16.mxu0 0
        %727 = vmatpush1.bf16.msra.mxu0 %v634
        %728 = vmatprep.subr.bf16.mxu0 0
        %729 = vmatpush2.bf16.msra.mxu0 0
        %730 = vmatprep.subr.bf16.mxu0 0
        %731 = vmatpush2.bf16.msra.mxu0 0
        %732 = vmatprep.subr.bf16.mxu0 0
        %733 = vmatpush2.bf16.msra.mxu0 0
        %734 = vmatprep.subr.bf16.mxu0 0
        %735 = vmatpush2.bf16.msra.mxu0 0
        %736 = vmatprep.subr.bf16.mxu0 0
        %737 = vmatpush2.bf16.msra.mxu0 0
        %738 = vmatprep.subr.bf16.mxu0 0
        %739 = vmatpush2.bf16.msra.mxu0 0
        %740 = vmatprep.subr.bf16.mxu0 0
        %741 = vmatpush2.bf16.msra.mxu0 0
        %742 = vmatprep.subr.bf16.mxu0 0
        %743 = vmatpush2.bf16.msra.mxu0 0
        %744 = vmatprep.mubr.bf16.mxu0 0
        %745 = vmatmul.mubr.bf16.gmra.mxu0 %v710
        %v746 = vpop.f32.mrf.mxu0
        %v747 = vadd.f32 0.0, %v746
        %v748 = vpop.f32.mrf.mxu0
        %v749 = vpop.f32.mrf.mxu0
        %v750 = vadd.f32 0.0, %v749
        %v751 = vpop.f32.mrf.mxu0
        %752 = vdwg.mxu0
        %754 = vrot.lane.b32.xlu0 %v632, 96
        %v755 = vpop.permute.xlu0 %754
        %757 = vrot.lane.b32.xlu0 %v633, 96
        %v758 = vpop.permute.xlu0 %757
        %v760 = vsel %vm635, %v755, 0
        %v763 = vsel %vm635, %v758, 0
        %765 = vmatprep.subr.bf16.mxu0 0
        %766 = vmatpush1.bf16.xpose.msra.mxu0 0
        %767 = vmatprep.subr.bf16.mxu0 0
        %768 = vmatpush1.bf16.xpose.msra.mxu0 0
        %769 = vmatprep.subr.bf16.mxu0 0
        %770 = vmatpush1.bf16.xpose.msra.mxu0 0
        %771 = vmatprep.subr.bf16.mxu0 0
        %772 = vmatpush1.bf16.xpose.msra.mxu0 0
        %773 = vmatprep.subr.bf16.mxu0 0
        %774 = vmatpush1.bf16.xpose.msra.mxu0 0
        %775 = vmatprep.subr.bf16.mxu0 0
        %776 = vmatpush1.bf16.xpose.msra.mxu0 0
        %777 = vmatprep.subr.bf16.mxu0 0
        %778 = vmatpush1.bf16.xpose.msra.mxu0 0
        %779 = vmatprep.subr.bf16.mxu0 0
        %780 = vmatpush1.bf16.xpose.msra.mxu0 %v763
        %781 = vmatprep.subr.bf16.mxu0 0
        %782 = vmatpush2.bf16.xpose.msra.mxu0 0
        %783 = vmatprep.subr.bf16.mxu0 0
        %784 = vmatpush2.bf16.xpose.msra.mxu0 0
        %785 = vmatprep.subr.bf16.mxu0 0
        %786 = vmatpush2.bf16.xpose.msra.mxu0 0
        %787 = vmatprep.subr.bf16.mxu0 0
        %788 = vmatpush2.bf16.xpose.msra.mxu0 0
        %789 = vmatprep.subr.bf16.mxu0 0
        %790 = vmatpush2.bf16.xpose.msra.mxu0 0
        %791 = vmatprep.subr.bf16.mxu0 0
        %792 = vmatpush2.bf16.xpose.msra.mxu0 0
        %793 = vmatprep.subr.bf16.mxu0 0
        %794 = vmatpush2.bf16.xpose.msra.mxu0 0
        %795 = vmatprep.subr.bf16.mxu0 0
        %796 = vmatpush2.bf16.xpose.msra.mxu0 0
        %797 = vmatprep.mubr.bf16.mxu0 0
        %798 = vmatmul.mubr.bf16.gmra.mxu0 %v760
        %v799 = vpop.f32.mrf.mxu0
        %v800 = vadd.f32 0.0, %v799
        %v801 = vpop.f32.mrf.mxu0
        %v802 = vpop.f32.mrf.mxu0
        %v803 = vadd.f32 0.0, %v802
        %v804 = vpop.f32.mrf.mxu0
        %805 = vdwg.mxu0
        %v806 = vmul.f32 %v800, 0.17677669
        %v807 = vmul.f32 %v803, 0.17677669
        %v808 = vsel %vm685, %v806, -inf
        %809 = vmax.xlane.f32.xlu0 %v808
        %v810 = vpop.xlane.xlu0 %809
        %v811 = vsel %vm685, %v807, -inf
        %812 = vmax.xlane.f32.xlu0 %v811
        %v813 = vpop.xlane.xlu0 %812
        %v814 = vsub.f32 %v806, %v810
        %v815 = vsub.f32 %v807, %v813
        %v816 = vmul.f32 %v814, 1.442695
        %v817 = vpow.pop %v816
        %v818 = vmul.f32 %v815, 1.442695
        %v819 = vpow.pop %v818
        %v820 = vsel %vm685, %v817, 0.0
        %821 = vadd.xlane.f32.xlu0 %v820
        %v822 = vpop.xlane.xlu0 %821
        %v823 = vsel %vm685, %v819, 0.0
        %824 = vadd.xlane.f32.xlu0 %v823
        %v825 = vpop.xlane.xlu0 %824
        %v826 = vrcp.pop %v822
        %v827 = vmul.f32 %v817, %v826
        %v828 = vrcp.pop %v825
        %v829 = vmul.f32 %v819, %v828
        %v830 = vpack.c.bf16 %v829, %v827
        %832 = vrot.lane.b32.xlu0 %v634, 96
        %v833 = vpop.permute.xlu0 %832
        %v836 = vsel %vm685, %v830, 0
        %838 = vmatprep.subr.bf16.mxu0 0
        %839 = vmatpush1.bf16.msra.mxu0 0
        %840 = vmatprep.subr.bf16.mxu0 0
        %841 = vmatpush1.bf16.msra.mxu0 0
        %842 = vmatprep.subr.bf16.mxu0 0
        %843 = vmatpush1.bf16.msra.mxu0 0
        %844 = vmatprep.subr.bf16.mxu0 0
        %845 = vmatpush1.bf16.msra.mxu0 0
        %846 = vmatprep.subr.bf16.mxu0 0
        %847 = vmatpush1.bf16.msra.mxu0 0
        %848 = vmatprep.subr.bf16.mxu0 0
        %849 = vmatpush1.bf16.msra.mxu0 0
        %850 = vmatprep.subr.bf16.mxu0 0
        %851 = vmatpush1.bf16.msra.mxu0 0
        %852 = vmatprep.subr.bf16.mxu0 0
        %853 = vmatpush1.bf16.msra.mxu0 %v833
        %854 = vmatprep.subr.bf16.mxu0 0
        %855 = vmatpush2.bf16.msra.mxu0 0
        %856 = vmatprep.subr.bf16.mxu0 0
        %857 = vmatpush2.bf16.msra.mxu0 0
        %858 = vmatprep.subr.bf16.mxu0 0
        %859 = vmatpush2.bf16.msra.mxu0 0
        %860 = vmatprep.subr.bf16.mxu0 0
        %861 = vmatpush2.bf16.msra.mxu0 0
        %862 = vmatprep.subr.bf16.mxu0 0
        %863 = vmatpush2.bf16.msra.mxu0 0
        %864 = vmatprep.subr.bf16.mxu0 0
        %865 = vmatpush2.bf16.msra.mxu0 0
        %866 = vmatprep.subr.bf16.mxu0 0
        %867 = vmatpush2.bf16.msra.mxu0 0
        %868 = vmatprep.subr.bf16.mxu0 0
        %869 = vmatpush2.bf16.msra.mxu0 0
        %870 = vmatprep.mubr.bf16.mxu0 0
        %871 = vmatmul.mubr.bf16.gmra.mxu0 %v836
        %v872 = vpop.f32.mrf.mxu0
        %v873 = vadd.f32 0.0, %v872
        %v874 = vpop.f32.mrf.mxu0
        %v875 = vpop.f32.mrf.mxu0
        %v876 = vadd.f32 0.0, %v875
        %v877 = vpop.f32.mrf.mxu0
        %878 = vdwg.mxu0
        %879 = vrot.lane.b32.xlu0 %v632, 64
        %v880 = vpop.permute.xlu0 %879
        %881 = vrot.lane.b32.xlu0 %v633, 64
        %v882 = vpop.permute.xlu0 %881
        %v884 = vsel %vm635, %v880, 0
        %v887 = vsel %vm635, %v882, 0
        %889 = vmatprep.subr.bf16.mxu0 0
        %890 = vmatpush1.bf16.xpose.msra.mxu0 0
        %891 = vmatprep.subr.bf16.mxu0 0
        %892 = vmatpush1.bf16.xpose.msra.mxu0 0
        %893 = vmatprep.subr.bf16.mxu0 0
        %894 = vmatpush1.bf16.xpose.msra.mxu0 0
        %895 = vmatprep.subr.bf16.mxu0 0
        %896 = vmatpush1.bf16.xpose.msra.mxu0 0
        %897 = vmatprep.subr.bf16.mxu0 0
        %898 = vmatpush1.bf16.xpose.msra.mxu0 0
        %899 = vmatprep.subr.bf16.mxu0 0
        %900 = vmatpush1.bf16.xpose.msra.mxu0 0
        %901 = vmatprep.subr.bf16.mxu0 0
        %902 = vmatpush1.bf16.xpose.msra.mxu0 0
        %903 = vmatprep.subr.bf16.mxu0 0
        %904 = vmatpush1.bf16.xpose.msra.mxu0 %v887
        %905 = vmatprep.subr.bf16.mxu0 0
        %906 = vmatpush2.bf16.xpose.msra.mxu0 0
        %907 = vmatprep.subr.bf16.mxu0 0
        %908 = vmatpush2.bf16.xpose.msra.mxu0 0
        %909 = vmatprep.subr.bf16.mxu0 0
        %910 = vmatpush2.bf16.xpose.msra.mxu0 0
        %911 = vmatprep.subr.bf16.mxu0 0
        %912 = vmatpush2.bf16.xpose.msra.mxu0 0
        %913 = vmatprep.subr.bf16.mxu0 0
        %914 = vmatpush2.bf16.xpose.msra.mxu0 0
        %915 = vmatprep.subr.bf16.mxu0 0
        %916 = vmatpush2.bf16.xpose.msra.mxu0 0
        %917 = vmatprep.subr.bf16.mxu0 0
        %918 = vmatpush2.bf16.xpose.msra.mxu0 0
        %919 = vmatprep.subr.bf16.mxu0 0
        %920 = vmatpush2.bf16.xpose.msra.mxu0 0
        %921 = vmatprep.mubr.bf16.mxu0 0
        %922 = vmatmul.mubr.bf16.gmra.mxu0 %v884
        %v923 = vpop.f32.mrf.mxu0
        %v924 = vadd.f32 0.0, %v923
        %v925 = vpop.f32.mrf.mxu0
        %v926 = vpop.f32.mrf.mxu0
        %v927 = vadd.f32 0.0, %v926
        %v928 = vpop.f32.mrf.mxu0
        %929 = vdwg.mxu0
        %v930 = vmul.f32 %v924, 0.17677669
        %v931 = vmul.f32 %v927, 0.17677669
        %v932 = vsel %vm685, %v930, -inf
        %933 = vmax.xlane.f32.xlu0 %v932
        %v934 = vpop.xlane.xlu0 %933
        %v935 = vsel %vm685, %v931, -inf
        %936 = vmax.xlane.f32.xlu0 %v935
        %v937 = vpop.xlane.xlu0 %936
        %v938 = vsub.f32 %v930, %v934
        %v939 = vsub.f32 %v931, %v937
        %v940 = vmul.f32 %v938, 1.442695
        %v941 = vpow.pop %v940
        %v942 = vmul.f32 %v939, 1.442695
        %v943 = vpow.pop %v942
        %v944 = vsel %vm685, %v941, 0.0
        %945 = vadd.xlane.f32.xlu0 %v944
        %v946 = vpop.xlane.xlu0 %945
        %v947 = vsel %vm685, %v943, 0.0
        %948 = vadd.xlane.f32.xlu0 %v947
        %v949 = vpop.xlane.xlu0 %948
        %v950 = vrcp.pop %v946
        %v951 = vmul.f32 %v941, %v950
        %v952 = vrcp.pop %v949
        %v953 = vmul.f32 %v943, %v952
        %v954 = vpack.c.bf16 %v953, %v951
        %955 = vrot.lane.b32.xlu0 %v634, 64
        %v956 = vpop.permute.xlu0 %955
        %v959 = vsel %vm685, %v954, 0
        %961 = vmatprep.subr.bf16.mxu0 0
        %962 = vmatpush1.bf16.msra.mxu0 0
        %963 = vmatprep.subr.bf16.mxu0 0
        %964 = vmatpush1.bf16.msra.mxu0 0
        %965 = vmatprep.subr.bf16.mxu0 0
        %966 = vmatpush1.bf16.msra.mxu0 0
        %967 = vmatprep.subr.bf16.mxu0 0
        %968 = vmatpush1.bf16.msra.mxu0 0
        %969 = vmatprep.subr.bf16.mxu0 0
        %970 = vmatpush1.bf16.msra.mxu0 0
        %971 = vmatprep.subr.bf16.mxu0 0
        %972 = vmatpush1.bf16.msra.mxu0 0
        %973 = vmatprep.subr.bf16.mxu0 0
        %974 = vmatpush1.bf16.msra.mxu0 0
        %975 = vmatprep.subr.bf16.mxu0 0
        %976 = vmatpush1.bf16.msra.mxu0 %v956
        %977 = vmatprep.subr.bf16.mxu0 0
        %978 = vmatpush2.bf16.msra.mxu0 0
        %979 = vmatprep.subr.bf16.mxu0 0
        %980 = vmatpush2.bf16.msra.mxu0 0
        %981 = vmatprep.subr.bf16.mxu0 0
        %982 = vmatpush2.bf16.msra.mxu0 0
        %983 = vmatprep.subr.bf16.mxu0 0
        %984 = vmatpush2.bf16.msra.mxu0 0
        %985 = vmatprep.subr.bf16.mxu0 0
        %986 = vmatpush2.bf16.msra.mxu0 0
        %987 = vmatprep.subr.bf16.mxu0 0
        %988 = vmatpush2.bf16.msra.mxu0 0
        %989 = vmatprep.subr.bf16.mxu0 0
        %990 = vmatpush2.bf16.msra.mxu0 0
        %991 = vmatprep.subr.bf16.mxu0 0
        %992 = vmatpush2.bf16.msra.mxu0 0
        %993 = vmatprep.mubr.bf16.mxu0 0
        %994 = vmatmul.mubr.bf16.gmra.mxu0 %v959
        %v995 = vpop.f32.mrf.mxu0
        %v996 = vadd.f32 0.0, %v995
        %v997 = vpop.f32.mrf.mxu0
        %v998 = vpop.f32.mrf.mxu0
        %v999 = vadd.f32 0.0, %v998
        %v1000 = vpop.f32.mrf.mxu0
        %1001 = vdwg.mxu0
        %1002 = vrot.lane.b32.xlu0 %v632, 32
        %v1003 = vpop.permute.xlu0 %1002
        %1004 = vrot.lane.b32.xlu0 %v633, 32
        %v1005 = vpop.permute.xlu0 %1004
        %v1007 = vsel %vm635, %v1003, 0
        %v1010 = vsel %vm635, %v1005, 0
        %1012 = vmatprep.subr.bf16.mxu0 0
        %1013 = vmatpush1.bf16.xpose.msra.mxu0 0
        %1014 = vmatprep.subr.bf16.mxu0 0
        %1015 = vmatpush1.bf16.xpose.msra.mxu0 0
        %1016 = vmatprep.subr.bf16.mxu0 0
        %1017 = vmatpush1.bf16.xpose.msra.mxu0 0
        %1018 = vmatprep.subr.bf16.mxu0 0
        %1019 = vmatpush1.bf16.xpose.msra.mxu0 0
        %1020 = vmatprep.subr.bf16.mxu0 0
        %1021 = vmatpush1.bf16.xpose.msra.mxu0 0
        %1022 = vmatprep.subr.bf16.mxu0 0
        %1023 = vmatpush1.bf16.xpose.msra.mxu0 0
        %1024 = vmatprep.subr.bf16.mxu0 0
        %1025 = vmatpush1.bf16.xpose.msra.mxu0 0
        %1026 = vmatprep.subr.bf16.mxu0 0
        %1027 = vmatpush1.bf16.xpose.msra.mxu0 %v1010
        %1028 = vmatprep.subr.bf16.mxu0 0
        %1029 = vmatpush2.bf16.xpose.msra.mxu0 0
        %1030 = vmatprep.subr.bf16.mxu0 0
        %1031 = vmatpush2.bf16.xpose.msra.mxu0 0
        %1032 = vmatprep.subr.bf16.mxu0 0
        %1033 = vmatpush2.bf16.xpose.msra.mxu0 0
        %1034 = vmatprep.subr.bf16.mxu0 0
        %1035 = vmatpush2.bf16.xpose.msra.mxu0 0
        %1036 = vmatprep.subr.bf16.mxu0 0
        %1037 = vmatpush2.bf16.xpose.msra.mxu0 0
        %1038 = vmatprep.subr.bf16.mxu0 0
        %1039 = vmatpush2.bf16.xpose.msra.mxu0 0
        %1040 = vmatprep.subr.bf16.mxu0 0
        %1041 = vmatpush2.bf16.xpose.msra.mxu0 0
        %1042 = vmatprep.subr.bf16.mxu0 0
        %1043 = vmatpush2.bf16.xpose.msra.mxu0 0
        %1044 = vmatprep.mubr.bf16.mxu0 0
        %1045 = vmatmul.mubr.bf16.gmra.mxu0 %v1007
        %v1046 = vpop.f32.mrf.mxu0
        %v1047 = vadd.f32 0.0, %v1046
        %v1048 = vpop.f32.mrf.mxu0
        %v1049 = vpop.f32.mrf.mxu0
        %v1050 = vadd.f32 0.0, %v1049
        %v1051 = vpop.f32.mrf.mxu0
        %1052 = vdwg.mxu0
        %v1053 = vmul.f32 %v1047, 0.17677669
        %v1054 = vmul.f32 %v1050, 0.17677669
        %v1055 = vsel %vm685, %v1053, -inf
        %1056 = vmax.xlane.f32.xlu0 %v1055
        %v1057 = vpop.xlane.xlu0 %1056
        %v1058 = vsel %vm685, %v1054, -inf
        %1059 = vmax.xlane.f32.xlu0 %v1058
        %v1060 = vpop.xlane.xlu0 %1059
        %v1061 = vsub.f32 %v1053, %v1057
        %v1062 = vsub.f32 %v1054, %v1060
        %v1063 = vmul.f32 %v1061, 1.442695
        %v1064 = vpow.pop %v1063
        %v1065 = vmul.f32 %v1062, 1.442695
        %v1066 = vpow.pop %v1065
        %v1067 = vsel %vm685, %v1064, 0.0
        %1068 = vadd.xlane.f32.xlu0 %v1067
        %v1069 = vpop.xlane.xlu0 %1068
        %v1070 = vsel %vm685, %v1066, 0.0
        %1071 = vadd.xlane.f32.xlu0 %v1070
        %v1072 = vpop.xlane.xlu0 %1071
        %v1073 = vrcp.pop %v1069
        %v1074 = vmul.f32 %v1064, %v1073
        %v1075 = vrcp.pop %v1072
        %v1076 = vmul.f32 %v1066, %v1075
        %v1077 = vpack.c.bf16 %v1076, %v1074
        %1078 = vrot.lane.b32.xlu0 %v634, 32
        %v1079 = vpop.permute.xlu0 %1078
        %v1082 = vsel %vm685, %v1077, 0
        %1084 = vmatprep.subr.bf16.mxu0 0
        %1085 = vmatpush1.bf16.msra.mxu0 0
        %1086 = vmatprep.subr.bf16.mxu0 0
        %1087 = vmatpush1.bf16.msra.mxu0 0
        %1088 = vmatprep.subr.bf16.mxu0 0
        %1089 = vmatpush1.bf16.msra.mxu0 0
        %1090 = vmatprep.subr.bf16.mxu0 0
        %1091 = vmatpush1.bf16.msra.mxu0 0
        %1092 = vmatprep.subr.bf16.mxu0 0
        %1093 = vmatpush1.bf16.msra.mxu0 0
        %1094 = vmatprep.subr.bf16.mxu0 0
        %1095 = vmatpush1.bf16.msra.mxu0 0
        %1096 = vmatprep.subr.bf16.mxu0 0
        %1097 = vmatpush1.bf16.msra.mxu0 0
        %1098 = vmatprep.subr.bf16.mxu0 0
        %1099 = vmatpush1.bf16.msra.mxu0 %v1079
        %1100 = vmatprep.subr.bf16.mxu0 0
        %1101 = vmatpush2.bf16.msra.mxu0 0
        %1102 = vmatprep.subr.bf16.mxu0 0
        %1103 = vmatpush2.bf16.msra.mxu0 0
        %1104 = vmatprep.subr.bf16.mxu0 0
        %1105 = vmatpush2.bf16.msra.mxu0 0
        %1106 = vmatprep.subr.bf16.mxu0 0
        %1107 = vmatpush2.bf16.msra.mxu0 0
        %1108 = vmatprep.subr.bf16.mxu0 0
        %1109 = vmatpush2.bf16.msra.mxu0 0
        %1110 = vmatprep.subr.bf16.mxu0 0
        %1111 = vmatpush2.bf16.msra.mxu0 0
        %1112 = vmatprep.subr.bf16.mxu0 0
        %1113 = vmatpush2.bf16.msra.mxu0 0
        %1114 = vmatprep.subr.bf16.mxu0 0
        %1115 = vmatpush2.bf16.msra.mxu0 0
        %1116 = vmatprep.mubr.bf16.mxu0 0
        %1117 = vmatmul.mubr.bf16.gmra.mxu0 %v1082
        %v1118 = vpop.f32.mrf.mxu0
        %v1119 = vadd.f32 0.0, %v1118
        %v1120 = vpop.f32.mrf.mxu0
        %v1121 = vpop.f32.mrf.mxu0
        %v1122 = vadd.f32 0.0, %v1121
        %v1123 = vpop.f32.mrf.mxu0
        %1124 = vdwg.mxu0
        %1127 = vrot.lane.b32.xlu0 %v873, 32
        %v1128 = vpop.permute.xlu0 %1127
        %1129 = vrot.lane.b32.xlu0 %v876, 32
        %v1130 = vpop.permute.xlu0 %1129
        %1135 = vrot.lane.b32.xlu0 %v996, 64
        %v1136 = vpop.permute.xlu0 %1135
        %1137 = vrot.lane.b32.xlu0 %v999, 64
        %v1138 = vpop.permute.xlu0 %1137
        %1143 = vrot.lane.b32.xlu0 %v1119, 96
        %v1144 = vpop.permute.xlu0 %1143
        %1145 = vrot.lane.b32.xlu0 %v1122, 96
        %v1146 = vpop.permute.xlu0 %1145
        %v1149 = vsel %vm635, %v747, %v1128
        %v1150 = vsel %vm635, %v750, %v1130
        %vm1151 = vcmask 523264
        %v1152 = vsel %vm1151, %v1149, %v1136
        %v1153 = vsel %vm1151, %v1150, %v1138
        %vm1154 = vcmask 785408
        %v1155 = vsel %vm1154, %v1152, %v1144
        %v1156 = vsel %vm1154, %v1153, %v1146
        %v1157 = vpack.c.bf16 %v1156, %v1155
        %v1158 = vld [vmem:[#allocation7] sm:$0xf]
        %v1159 = vld [vmem:[#allocation7 + $0x4] sm:$0xf]
        %v1160 = vld [vmem:[#allocation7 + $0x8] sm:$0xf]
        %v1161 = vld [vmem:[#allocation7 + $0xc] sm:$0xf]
        %v1162 = vld [vmem:[#allocation7 + $0x10] sm:$0xf]
        %v1163 = vld [vmem:[#allocation7 + $0x14] sm:$0xf]
        %v1164 = vld [vmem:[#allocation7 + $0x18] sm:$0xf]
        %v1165 = vld [vmem:[#allocation7 + $0x1c] sm:$0xf]
        %v1166 = vld [vmem:[#allocation7 + $0x20] sm:$0xf]
        %v1167 = vld [vmem:[#allocation7 + $0x24] sm:$0xf]
        %v1168 = vld [vmem:[#allocation7 + $0x28] sm:$0xf]
        %v1169 = vld [vmem:[#allocation7 + $0x2c] sm:$0xf]
        %v1170 = vld [vmem:[#allocation7 + $0x30] sm:$0xf]
        %v1171 = vld [vmem:[#allocation7 + $0x34] sm:$0xf]
        %v1172 = vld [vmem:[#allocation7 + $0x38] sm:$0xf]
        %v1173 = vld [vmem:[#allocation7 + $0x3c] sm:$0xf]
        %v1174 = vld [vmem:[%s6] sm:$0x1]
        %v1176 = vlaneseq
        %v1177 = vshrl.u32 %v1176, 7
        %v1178 = vsub.s32 0, %v1177
        %v1179 = vrot.slane %v1174, %v1178
        %v1197 = vunpack.c.l.b16 %v1158
        %v1198 = vunpack.c.l.b16 %v1159
        %v1199 = vunpack.c.l.b16 %v1160
        %v1200 = vunpack.c.l.b16 %v1161
        %v1201 = vunpack.c.l.b16 %v1162
        %v1202 = vunpack.c.l.b16 %v1163
        %v1203 = vunpack.c.l.b16 %v1164
        %v1204 = vunpack.c.l.b16 %v1165
        %v1205 = vunpack.c.l.b16 %v1166
        %v1206 = vunpack.c.l.b16 %v1167
        %v1207 = vunpack.c.l.b16 %v1168
        %v1208 = vunpack.c.l.b16 %v1169
        %v1209 = vunpack.c.l.b16 %v1170
        %v1210 = vunpack.c.l.b16 %v1171
        %v1211 = vunpack.c.l.b16 %v1172
        %v1212 = vunpack.c.l.b16 %v1173
        %v1213 = vpack.c.b16 %v1198, %v1197
        %v1214 = vpack.c.b16 %v1200, %v1199
        %v1215 = vpack.c.b16 %v1202, %v1201
        %v1216 = vpack.c.b16 %v1204, %v1203
        %v1217 = vpack.c.b16 %v1206, %v1205
        %v1218 = vpack.c.b16 %v1208, %v1207
        %v1219 = vpack.c.b16 %v1210, %v1209
        %v1220 = vpack.c.b16 %v1212, %v1211
        %1229 = vmatprep.subr.bf16.mxu0 0
        %1230 = vmatpush1.bf16.msra.mxu0 %v1220
        %1231 = vmatprep.subr.bf16.mxu0 0
        %1232 = vmatpush1.bf16.msra.mxu0 %v1219
        %1233 = vmatprep.subr.bf16.mxu0 0
        %1234 = vmatpush1.bf16.msra.mxu0 %v1218
        %1235 = vmatprep.subr.bf16.mxu0 0
        %1236 = vmatpush1.bf16.msra.mxu0 %v1217
        %1237 = vmatprep.subr.bf16.mxu0 0
        %1238 = vmatpush1.bf16.msra.mxu0 %v1216
        %1239 = vmatprep.subr.bf16.mxu0 0
        %1240 = vmatpush1.bf16.msra.mxu0 %v1215
        %1241 = vmatprep.subr.bf16.mxu0 0
        %1242 = vmatpush1.bf16.msra.mxu0 %v1214
        %1243 = vmatprep.subr.bf16.mxu0 0
        %1244 = vmatpush1.bf16.msra.mxu0 %v1213
        %1245 = vmatprep.subr.bf16.mxu0 0
        %1246 = vmatpush2.bf16.msra.mxu0 0
        %1247 = vmatprep.subr.bf16.mxu0 0
        %1248 = vmatpush2.bf16.msra.mxu0 0
        %1249 = vmatprep.subr.bf16.mxu0 0
        %1250 = vmatpush2.bf16.msra.mxu0 0
        %1251 = vmatprep.subr.bf16.mxu0 0
        %1252 = vmatpush2.bf16.msra.mxu0 0
        %1253 = vmatprep.subr.bf16.mxu0 0
        %1254 = vmatpush2.bf16.msra.mxu0 0
        %1255 = vmatprep.subr.bf16.mxu0 0
        %1256 = vmatpush2.bf16.msra.mxu0 0
        %1257 = vmatprep.subr.bf16.mxu0 0
        %1258 = vmatpush2.bf16.msra.mxu0 0
        %1259 = vmatprep.subr.bf16.mxu0 0
        %1260 = vmatpush2.bf16.msra.mxu0 0
        %1261 = vmatprep.mubr.bf16.mxu0 0
        %1262 = vmatmul.mubr.bf16.gmra.mxu0 %v1157
        %v1263 = vpop.f32.mrf.mxu0
        %v1264 = vadd.f32 %v1179, %v1263
        %v1265 = vpop.f32.mrf.mxu0
        %v1266 = vpop.f32.mrf.mxu0
        %v1267 = vadd.f32 %v1179, %v1266
        %v1268 = vpop.f32.mrf.mxu0
        %1269 = vdwg.mxu0
        %v1270 = vadd.f32 %v327, %v1264
        %v1271 = vadd.f32 %v328, %v1267
        %1272 = vst [vmem:[%s325] sm:$0xff] %v1270
        %1273 = vst [vmem:[%s325 + $0x8] sm:$0xff] %v1271
        %s1274 = sand.u32 %s185, 1
        %s1275 = scalar_lea.sflag [#allocation4], %s1274
        %s1276 = sand.u32 %s185, 1
        %s1277 = smul.addr %s1276, 16
        %s1278 = scalar_lea.vmem [#allocation8], %s1277
        // Predicated region
        $region61: #{tpu_custom_call.1} parent=47 // pred_check
          %p1279 = pneg %p195
        $region62: #{tpu_custom_call.1} parent=47 // pred_check_branch
          %1281 = sbr.rel (%p1279) target = $region64
        $region63: #{tpu_custom_call.1} parent=47 // pred_region
          %s1283 = ssub.s32 256, 256
          %1284 = vsyncadd %s1275, %s1283
          %s1285 = smul.addr %s25, 2
          %s1286 = smul.addr %s1285, 128
          %s1287 = scalar_lea.hbm %s7, %s1286
          %s1288 = sshll.u32 %s1278, 4
          %s1289 = int_to_ptr.vmem [resolvable:$true] %s1288
          %1294 = dma.vmem_to_hbm [thread:$0]  %s1289, 256, %s1287, %s1275, 128, 128, 8
        $region64: #{tpu_custom_call.1} parent=47 // pred_fallthru
          _
      $region48: #{tpu_custom_call.1} parent=5 // pred_fallthru
        _
      %p1295 = scmp.le.s32.totalorder 2, %s20
      // Predicated region
      $region65: #{tpu_custom_call.1} parent=5 // pred_check
        %p1296 = pneg %p1295
      $region66: #{tpu_custom_call.1} parent=5 // pred_check_branch
        %1298 = sbr.rel (%p1296) target = $region68
      $region67: #{tpu_custom_call.1} parent=5 // pred_region
        %s1299 = ssub.s32 %s20, 2
        // Predicated region
        $region69: #{tpu_custom_call.1} parent=67 // pred_check
          %p1300 = pneg %p201
        $region70: #{tpu_custom_call.1} parent=67 // pred_check_branch
          %1302 = sbr.rel (%p1300) target = $region72
        $region71: #{tpu_custom_call.1} parent=67 // pred_region
          %s1303 = sand.u32 %s186, 1
          %s1304 = scalar_lea.sflag [#allocation4], %s1303
          %s1305 = sand.u32 %s186, 1
          %s1306 = smul.addr %s1305, 16
          %s1307 = scalar_lea.vmem [#allocation8], %s1306
          %1308 = dma.done %s1304, 256
        $region72: #{tpu_custom_call.1} parent=67 // pred_fallthru
          _
      $region68: #{tpu_custom_call.1} parent=5 // pred_fallthru
        _
    $region6: #{tpu_custom_call.1} parent=1 // loop_footer
      %s24 = sadd.s32 1, %s20
    $region7: #{tpu_custom_call.1} parent=1 // loop_footer_branch
      %19 = sbr.rel target = $region3
    $region8: #{tpu_custom_call.1} parent=1 // loop_exit
      _
    %1309 = vsyncpa [#allocation3], 1
    %s1310 = scalar_lea.sflag [#allocation3], 1
    %1311 = vsyncpa %s1310, 1
    %1312 = vsyncpa [#allocation6], 1
    %1313 = vsyncpa [#allocation4], 1
    %s1314 = scalar_lea.sflag [#allocation4], 1
    %1315 = vsyncpa %s1314, 1

</llo_original>
